<compile_context>
chip_gen: v6e
topology: v6e:2x2x1
jax: 0.10.0
libtpu: 0.0.40
codegen_flags: <defaults>
</compile_context>

<pallas_src>
import math
from functools import partial

import jax
import jax.numpy as jnp
from jax import lax
from jax.experimental import pallas as pl
from jax.experimental.pallas import tpu as pltpu


def _attention_kernel(x_ref, gamma_ref, beta_ref, wqkv_ref, wo_ref, bo_ref,
                      alibi_ref, out_ref, ho_ref, *, heads, head_dim, eps):
    D = heads * head_dim

    # ---- LayerNorm (rsqrt -> EUP, no divide) --------------------------------
    x = x_ref[...].astype(jnp.float32)                       # [N, D]
    mu = jnp.mean(x, axis=-1, keepdims=True)
    xc = x - mu
    var = jnp.mean(xc * xc, axis=-1, keepdims=True)
    xn = xc * lax.rsqrt(var + eps)
    xn = xn * gamma_ref[...] + beta_ref[...]                  # [N, D]

    # ---- Fused QKV projection: one wide matmul ------------------------------
    # (W_q columns were pre-scaled by head_dim**-0.5 in the wrapper.)
    qkv = jnp.dot(xn, wqkv_ref[...],
                  preferred_element_type=jnp.float32)         # [N, 3D]

    # ---- Per-head attention, fully unrolled inside this grid step -----------
    for h in range(heads):
        lo = h * head_dim
        q = qkv[:, lo:lo + head_dim]                          # [N, d]
        k = qkv[:, D + lo:D + lo + head_dim]                  # [N, d]
        v = qkv[:, 2 * D + lo:2 * D + lo + head_dim]          # [N, d]

        # q @ k^T without materializing a transposed copy of k.
        s = lax.dot_general(q, k, (((1,), (1,)), ((), ())),
                            preferred_element_type=jnp.float32)  # [N, N]
        s = s + alibi_ref[h].astype(jnp.float32)

        # Numerically stable row softmax; reciprocal on the EUP slot.
        m = jnp.max(s, axis=-1, keepdims=True)
        p = jnp.exp(s - m)
        l = jnp.sum(p, axis=-1, keepdims=True)
        attn = p * pl.reciprocal(l, approx=True)

        # Stash this head's output into the (N, H*d) slab.
        ho_ref[:, lo:lo + head_dim] = jnp.dot(
            attn, v, preferred_element_type=jnp.float32)      # [N, d]

    # ---- Single wide output projection ---------------------------------------
    # NOTE: matmuls use default dot precision; at larger D either set the
    # precision explicitly or feed bf16 operands (f32 accumulation) on purpose.
    out = jnp.dot(ho_ref[...], wo_ref[...],
                  preferred_element_type=jnp.float32) + bo_ref[...]
    out_ref[...] = out.astype(out_ref.dtype)


def attention_forward(x, gamma, beta, w_qkv, w_out, b_out, alibi, *,
                      attention_heads=8, eps=1e-5):
    """Pallas forward of Attention.

    x:      [B, N, D]
    alibi:  [B, H, >=N, >=N]
    w_qkv:  [D, 3*D]   (torch create_qkv.weight.T, no bias)
    w_out:  [D, D], b_out: [D]   (torch out.weight.T / out.bias)
    gamma, beta: [D]   (LayerNorm affine params)
    """
    B, N, D = x.shape
    H = attention_heads
    d = D // H
    scale = float(d) ** -0.5

    # Pre-scale the Q columns of the fused QKV weight (replaces the O(N^2)
    # per-head score scaling inside the kernel).
    w_qkv_s = jnp.concatenate(
        [w_qkv[:, :D] * scale, w_qkv[:, D:]], axis=1).astype(jnp.float32)
    w_out = w_out.astype(jnp.float32)
    bo2 = b_out.reshape(1, D).astype(jnp.float32)
    gamma2 = gamma.reshape(1, D).astype(jnp.float32)
    beta2 = beta.reshape(1, D).astype(jnp.float32)
    alibi = alibi[:, :, :N, :N]

    kernel = partial(_attention_kernel, heads=H, head_dim=d, eps=eps)

    grid_spec = pltpu.PrefetchScalarGridSpec(
        num_scalar_prefetch=0,
        grid=(B,),
        in_specs=[
            pl.BlockSpec((None, N, D), lambda b: (b, 0, 0)),      # x[b]
            pl.BlockSpec((1, D), lambda b: (0, 0)),               # gamma
            pl.BlockSpec((1, D), lambda b: (0, 0)),               # beta
            pl.BlockSpec((D, 3 * D), lambda b: (0, 0)),           # W_qkv (resident)
            pl.BlockSpec((D, D), lambda b: (0, 0)),               # W_out (resident)
            pl.BlockSpec((1, D), lambda b: (0, 0)),               # b_out
            pl.BlockSpec((None, H, N, N), lambda b: (b, 0, 0, 0)),  # alibi[b]
        ],
        out_specs=pl.BlockSpec((None, N, D), lambda b: (b, 0, 0)),
        scratch_shapes=[
            pltpu.VMEM((N, D), jnp.float32),   # per-head output slab (N, H*d)
        ],
    )

    return pl.pallas_call(
        kernel,
        out_shape=jax.ShapeDtypeStruct((B, N, D), x.dtype),
        grid_spec=grid_spec,
        compiler_params=pltpu.CompilerParams(
            dimension_semantics=("parallel",)),
    )(x, gamma2, beta2, w_qkv_s, w_out, bo2, alibi)


def _reference(x, gamma, beta, w_qkv, w_out, b_out, alibi, heads, eps=1e-5):
    B, N, D = x.shape
    d = D // heads
    mu = x.mean(-1, keepdims=True)
    var = ((x - mu) ** 2).mean(-1, keepdims=True)
    xn = (x - mu) / jnp.sqrt(var + eps) * gamma + beta
    qkv = xn @ w_qkv
    q, k, v = jnp.split(qkv, 3, axis=-1)

    def to_heads(t):
        return t.reshape(B, N, heads, d).transpose(0, 2, 1, 3)

    q, k, v = map(to_heads, (q, k, v))
    scores = jnp.einsum('bhid,bhjd->bhij', q, k,
                        precision=lax.Precision.HIGHEST) * (d ** -0.5)
    scores = scores + alibi[:, :, :N, :N]
    attn = jax.nn.softmax(scores, axis=-1)
    out = jnp.einsum('bhij,bhjd->bhid', attn, v,
                     precision=lax.Precision.HIGHEST)
    out = out.transpose(0, 2, 1, 3).reshape(B, N, D)
    return out @ w_out + b_out


if __name__ == "__main__":
    # Small shapes implied by the module: batch=2, seq=8, dim=32, heads=8 (d=4).
    B, N, DIM, HEADS = 2, 8, 32, 8

    key = jax.random.PRNGKey(0)
    k_x, k_al, k_wqkv, k_wo, k_bo, k_g, k_b = jax.random.split(key, 7)

    x = jax.random.normal(k_x, (B, N, DIM), dtype=jnp.float32)
    alibi = 0.1 * jax.random.normal(k_al, (B, HEADS, N, N), dtype=jnp.float32)

    # nn.Linear-like init (uniform +/- 1/sqrt(fan_in)); weights stored as
    # [in, out] so the forward is x @ W (+ b).
    bound = 1.0 / math.sqrt(DIM)
    w_qkv = jax.random.uniform(k_wqkv, (DIM, 3 * DIM), jnp.float32, -bound, bound)
    w_out = jax.random.uniform(k_wo, (DIM, DIM), jnp.float32, -bound, bound)
    b_out = jax.random.uniform(k_bo, (DIM,), jnp.float32, -bound, bound)
    # LayerNorm affine params (random to exercise the full path).
    gamma = 1.0 + 0.1 * jax.random.normal(k_g, (DIM,), dtype=jnp.float32)
    beta = 0.1 * jax.random.normal(k_b, (DIM,), dtype=jnp.float32)

    out = attention_forward(x, gamma, beta, w_qkv, w_out, b_out, alibi,
                            attention_heads=HEADS)
    out = jax.block_until_ready(out)

    ref = _reference(x, gamma, beta, w_qkv, w_out, b_out, alibi, HEADS)
    assert out.shape == ref.shape, (out.shape, ref.shape)
    assert jnp.allclose(out, ref, rtol=2e-3, atol=2e-3), (
        float(jnp.max(jnp.abs(out - ref))))

    print("KERNEL_OK")
</pallas_src>

<mosaic_0001>
module attributes {stable_mosaic.version = 11 : i64} {
  func.func @_attention_kernel(%arg0: i32, %arg1: memref<1x8x32xf32, #tpu.memory_space<vmem>>, %arg2: memref<1x32xf32, #tpu.memory_space<vmem>>, %arg3: memref<1x32xf32, #tpu.memory_space<vmem>>, %arg4: memref<32x96xf32, #tpu.memory_space<vmem>>, %arg5: memref<32x32xf32, #tpu.memory_space<vmem>>, %arg6: memref<1x32xf32, #tpu.memory_space<vmem>>, %arg7: memref<1x8x8x8xf32, #tpu.memory_space<vmem>>, %arg8: memref<1x8x32xf32, #tpu.memory_space<vmem>>, %arg9: memref<8x32xf32, #tpu.memory_space<vmem>>) attributes {dimension_semantics = [#tpu.dimension_semantics<parallel>], iteration_bounds = array<i64: 2>, scalar_prefetch = 0 : i64, scratch_operands = 1 : i64, tpu.core_type = #tpu.core_type<tc>, window_params = [{transform_indices = @transform_0, window_bounds = array<i64: 1, 8, 32>}, {pipeline_mode = #tpu.pipeline_mode<synchronous>, transform_indices = @transform_1, window_bounds = array<i64: 1, 32>}, {pipeline_mode = #tpu.pipeline_mode<synchronous>, transform_indices = @transform_2, window_bounds = array<i64: 1, 32>}, {pipeline_mode = #tpu.pipeline_mode<synchronous>, transform_indices = @transform_3, window_bounds = array<i64: 32, 96>}, {pipeline_mode = #tpu.pipeline_mode<synchronous>, transform_indices = @transform_4, window_bounds = array<i64: 32, 32>}, {pipeline_mode = #tpu.pipeline_mode<synchronous>, transform_indices = @transform_5, window_bounds = array<i64: 1, 32>}, {transform_indices = @transform_6, window_bounds = array<i64: 1, 8, 8, 8>}, {transform_indices = @transform_7, window_bounds = array<i64: 1, 8, 32>}]} {
    %c0 = arith.constant 0 : index
    %c0_0 = arith.constant 0 : index
    %c0_1 = arith.constant 0 : index
    %0 = vector.load %arg1[%c0, %c0_0, %c0_1] : memref<1x8x32xf32, #tpu.memory_space<vmem>>, vector<1x8x32xf32>
    %1 = vector.shape_cast %0 : vector<1x8x32xf32> to vector<8x32xf32>
    %cst = arith.constant dense<0.000000e+00> : vector<8xf32>
    %2 = vector.multi_reduction <add>, %1, %cst [1] : vector<8x32xf32> to vector<8xf32>
    %3 = vector.shape_cast %2 : vector<8xf32> to vector<8x1xf32>
    %cst_2 = arith.constant 3.200000e+01 : f32
    %4 = vector.broadcast %cst_2 : f32 to vector<8x1xf32>
    %5 = arith.divf %3, %4 : vector<8x1xf32>
    %6 = vector.broadcast %5 : vector<8x1xf32> to vector<8x32xf32>
    %7 = arith.subf %1, %6 : vector<8x32xf32>
    %8 = arith.mulf %7, %7 : vector<8x32xf32>
    %cst_3 = arith.constant dense<0.000000e+00> : vector<8xf32>
    %9 = vector.multi_reduction <add>, %8, %cst_3 [1] : vector<8x32xf32> to vector<8xf32>
    %10 = vector.shape_cast %9 : vector<8xf32> to vector<8x1xf32>
    %cst_4 = arith.constant 3.200000e+01 : f32
    %11 = vector.broadcast %cst_4 : f32 to vector<8x1xf32>
    %12 = arith.divf %10, %11 : vector<8x1xf32>
    %cst_5 = arith.constant 9.99999974E-6 : f32
    %13 = vector.broadcast %cst_5 : f32 to vector<8x1xf32>
    %14 = arith.addf %12, %13 : vector<8x1xf32>
    %15 = math.rsqrt %14 : vector<8x1xf32>
    %16 = vector.broadcast %15 : vector<8x1xf32> to vector<8x32xf32>
    %17 = arith.mulf %7, %16 : vector<8x32xf32>
    %c0_6 = arith.constant 0 : index
    %c0_7 = arith.constant 0 : index
    %18 = vector.load %arg2[%c0_6, %c0_7] : memref<1x32xf32, #tpu.memory_space<vmem>>, vector<1x32xf32>
    %19 = vector.broadcast %18 : vector<1x32xf32> to vector<8x32xf32>
    %20 = arith.mulf %17, %19 : vector<8x32xf32>
    %c0_8 = arith.constant 0 : index
    %c0_9 = arith.constant 0 : index
    %21 = vector.load %arg3[%c0_8, %c0_9] : memref<1x32xf32, #tpu.memory_space<vmem>>, vector<1x32xf32>
    %22 = vector.broadcast %21 : vector<1x32xf32> to vector<8x32xf32>
    %23 = arith.addf %20, %22 : vector<8x32xf32>
    %c0_10 = arith.constant 0 : index
    %c0_11 = arith.constant 0 : index
    %24 = vector.load %arg4[%c0_10, %c0_11] : memref<32x96xf32, #tpu.memory_space<vmem>>, vector<32x96xf32>
    %cst_12 = arith.constant dense<0.000000e+00> : vector<8x96xf32>
    %25 = tpu.matmul %23, %24, %cst_12 {dimension_numbers = #tpu.dot_dimension_numbers<[1], [0], [0], [1], [0, 0, 1, 1], [], []>} : vector<8x32xf32>, vector<32x96xf32>, vector<8x96xf32> -> vector<8x96xf32>
    %26 = vector.extract_strided_slice %25 {offsets = [0, 0], sizes = [8, 4], strides = [1, 1]} : vector<8x96xf32> to vector<8x4xf32>
    %27 = vector.extract_strided_slice %25 {offsets = [0, 32], sizes = [8, 4], strides = [1, 1]} : vector<8x96xf32> to vector<8x4xf32>
    %28 = vector.extract_strided_slice %25 {offsets = [0, 64], sizes = [8, 4], strides = [1, 1]} : vector<8x96xf32> to vector<8x4xf32>
    %cst_13 = arith.constant dense<0.000000e+00> : vector<8x8xf32>
    %29 = tpu.matmul %26, %27, %cst_13 {dimension_numbers = #tpu.dot_dimension_numbers<[1], [1], [0], [0], [0, 0, 1, 0], [], []>} : vector<8x4xf32>, vector<8x4xf32>, vector<8x8xf32> -> vector<8x8xf32>
    %c0_14 = arith.constant 0 : index
    %c0_15 = arith.constant 0 : index
    %c0_16 = arith.constant 0 : index
    %c0_17 = arith.constant 0 : index
    %30 = vector.load %arg7[%c0_14, %c0_15, %c0_16, %c0_17] : memref<1x8x8x8xf32, #tpu.memory_space<vmem>>, vector<1x1x8x8xf32>
    %31 = vector.shape_cast %30 : vector<1x1x8x8xf32> to vector<8x8xf32>
    %32 = arith.addf %29, %31 : vector<8x8xf32>
    %cst_18 = arith.constant dense<0xFF800000> : vector<8xf32>
    %33 = vector.multi_reduction <maximumf>, %32, %cst_18 [1] : vector<8x8xf32> to vector<8xf32>
    %34 = vector.shape_cast %33 : vector<8xf32> to vector<8x1xf32>
    %35 = vector.broadcast %34 : vector<8x1xf32> to vector<8x8xf32>
    %36 = arith.subf %32, %35 : vector<8x8xf32>
    %37 = math.exp %36 : vector<8x8xf32>
    %cst_19 = arith.constant dense<0.000000e+00> : vector<8xf32>
    %38 = vector.multi_reduction <add>, %37, %cst_19 [1] : vector<8x8xf32> to vector<8xf32>
    %39 = vector.shape_cast %38 : vector<8xf32> to vector<8x1xf32>
    %40 = tpu.reciprocal %39 {approx = true} : vector<8x1xf32> -> vector<8x1xf32>
    %41 = vector.broadcast %40 : vector<8x1xf32> to vector<8x8xf32>
    %42 = arith.mulf %37, %41 : vector<8x8xf32>
    %cst_20 = arith.constant dense<0.000000e+00> : vector<8x4xf32>
    %43 = tpu.matmul %42, %28, %cst_20 {dimension_numbers = #tpu.dot_dimension_numbers<[1], [0], [0], [1], [0, 0, 1, 1], [], []>} : vector<8x8xf32>, vector<8x4xf32>, vector<8x4xf32> -> vector<8x4xf32>
    %c0_21 = arith.constant 0 : index
    %c0_22 = arith.constant 0 : index
    %44 = vector.load %arg9[%c0_21, %c0_22] : memref<8x32xf32, #tpu.memory_space<vmem>>, vector<8x4xf32>
    tpu.vector_store %arg9[%c0_21, %c0_22], %43 {strides = array<i32>} : memref<8x32xf32, #tpu.memory_space<vmem>>, vector<8x4xf32>,
    %45 = vector.extract_strided_slice %25 {offsets = [0, 4], sizes = [8, 4], strides = [1, 1]} : vector<8x96xf32> to vector<8x4xf32>
    %46 = vector.extract_strided_slice %25 {offsets = [0, 36], sizes = [8, 4], strides = [1, 1]} : vector<8x96xf32> to vector<8x4xf32>
    %47 = vector.extract_strided_slice %25 {offsets = [0, 68], sizes = [8, 4], strides = [1, 1]} : vector<8x96xf32> to vector<8x4xf32>
    %cst_23 = arith.constant dense<0.000000e+00> : vector<8x8xf32>
    %48 = tpu.matmul %45, %46, %cst_23 {dimension_numbers = #tpu.dot_dimension_numbers<[1], [1], [0], [0], [0, 0, 1, 0], [], []>} : vector<8x4xf32>, vector<8x4xf32>, vector<8x8xf32> -> vector<8x8xf32>
    %c0_24 = arith.constant 0 : index
    %c1 = arith.constant 1 : index
    %c0_25 = arith.constant 0 : index
    %c0_26 = arith.constant 0 : index
    %49 = vector.load %arg7[%c0_24, %c1, %c0_25, %c0_26] : memref<1x8x8x8xf32, #tpu.memory_space<vmem>>, vector<1x1x8x8xf32>
    %50 = vector.shape_cast %49 : vector<1x1x8x8xf32> to vector<8x8xf32>
    %51 = arith.addf %48, %50 : vector<8x8xf32>
    %cst_27 = arith.constant dense<0xFF800000> : vector<8xf32>
    %52 = vector.multi_reduction <maximumf>, %51, %cst_27 [1] : vector<8x8xf32> to vector<8xf32>
    %53 = vector.shape_cast %52 : vector<8xf32> to vector<8x1xf32>
    %54 = vector.broadcast %53 : vector<8x1xf32> to vector<8x8xf32>
    %55 = arith.subf %51, %54 : vector<8x8xf32>
    %56 = math.exp %55 : vector<8x8xf32>
    %cst_28 = arith.constant dense<0.000000e+00> : vector<8xf32>
    %57 = vector.multi_reduction <add>, %56, %cst_28 [1] : vector<8x8xf32> to vector<8xf32>
    %58 = vector.shape_cast %57 : vector<8xf32> to vector<8x1xf32>
    %59 = tpu.reciprocal %58 {approx = true} : vector<8x1xf32> -> vector<8x1xf32>
    %60 = vector.broadcast %59 : vector<8x1xf32> to vector<8x8xf32>
    %61 = arith.mulf %56, %60 : vector<8x8xf32>
    %cst_29 = arith.constant dense<0.000000e+00> : vector<8x4xf32>
    %62 = tpu.matmul %61, %47, %cst_29 {dimension_numbers = #tpu.dot_dimension_numbers<[1], [0], [0], [1], [0, 0, 1, 1], [], []>} : vector<8x8xf32>, vector<8x4xf32>, vector<8x4xf32> -> vector<8x4xf32>
    %c0_30 = arith.constant 0 : index
    %c4 = arith.constant 4 : index
    %63 = vector.load %arg9[%c0_30, %c4] : memref<8x32xf32, #tpu.memory_space<vmem>>, vector<8x4xf32>
    tpu.vector_store %arg9[%c0_30, %c4], %62 {strides = array<i32>} : memref<8x32xf32, #tpu.memory_space<vmem>>, vector<8x4xf32>,
    %64 = vector.extract_strided_slice %25 {offsets = [0, 8], sizes = [8, 4], strides = [1, 1]} : vector<8x96xf32> to vector<8x4xf32>
    %65 = vector.extract_strided_slice %25 {offsets = [0, 40], sizes = [8, 4], strides = [1, 1]} : vector<8x96xf32> to vector<8x4xf32>
    %66 = vector.extract_strided_slice %25 {offsets = [0, 72], sizes = [8, 4], strides = [1, 1]} : vector<8x96xf32> to vector<8x4xf32>
    %cst_31 = arith.constant dense<0.000000e+00> : vector<8x8xf32>
    %67 = tpu.matmul %64, %65, %cst_31 {dimension_numbers = #tpu.dot_dimension_numbers<[1], [1], [0], [0], [0, 0, 1, 0], [], []>} : vector<8x4xf32>, vector<8x4xf32>, vector<8x8xf32> -> vector<8x8xf32>
    %c0_32 = arith.constant 0 : index
    %c2 = arith.constant 2 : index
    %c0_33 = arith.constant 0 : index
    %c0_34 = arith.constant 0 : index
    %68 = vector.load %arg7[%c0_32, %c2, %c0_33, %c0_34] : memref<1x8x8x8xf32, #tpu.memory_space<vmem>>, vector<1x1x8x8xf32>
    %69 = vector.shape_cast %68 : vector<1x1x8x8xf32> to vector<8x8xf32>
    %70 = arith.addf %67, %69 : vector<8x8xf32>
    %cst_35 = arith.constant dense<0xFF800000> : vector<8xf32>
    %71 = vector.multi_reduction <maximumf>, %70, %cst_35 [1] : vector<8x8xf32> to vector<8xf32>
    %72 = vector.shape_cast %71 : vector<8xf32> to vector<8x1xf32>
    %73 = vector.broadcast %72 : vector<8x1xf32> to vector<8x8xf32>
    %74 = arith.subf %70, %73 : vector<8x8xf32>
    %75 = math.exp %74 : vector<8x8xf32>
    %cst_36 = arith.constant dense<0.000000e+00> : vector<8xf32>
    %76 = vector.multi_reduction <add>, %75, %cst_36 [1] : vector<8x8xf32> to vector<8xf32>
    %77 = vector.shape_cast %76 : vector<8xf32> to vector<8x1xf32>
    %78 = tpu.reciprocal %77 {approx = true} : vector<8x1xf32> -> vector<8x1xf32>
    %79 = vector.broadcast %78 : vector<8x1xf32> to vector<8x8xf32>
    %80 = arith.mulf %75, %79 : vector<8x8xf32>
    %cst_37 = arith.constant dense<0.000000e+00> : vector<8x4xf32>
    %81 = tpu.matmul %80, %66, %cst_37 {dimension_numbers = #tpu.dot_dimension_numbers<[1], [0], [0], [1], [0, 0, 1, 1], [], []>} : vector<8x8xf32>, vector<8x4xf32>, vector<8x4xf32> -> vector<8x4xf32>
    %c0_38 = arith.constant 0 : index
    %c8 = arith.constant 8 : index
    %82 = vector.load %arg9[%c0_38, %c8] : memref<8x32xf32, #tpu.memory_space<vmem>>, vector<8x4xf32>
    tpu.vector_store %arg9[%c0_38, %c8], %81 {strides = array<i32>} : memref<8x32xf32, #tpu.memory_space<vmem>>, vector<8x4xf32>,
    %83 = vector.extract_strided_slice %25 {offsets = [0, 12], sizes = [8, 4], strides = [1, 1]} : vector<8x96xf32> to vector<8x4xf32>
    %84 = vector.extract_strided_slice %25 {offsets = [0, 44], sizes = [8, 4], strides = [1, 1]} : vector<8x96xf32> to vector<8x4xf32>
    %85 = vector.extract_strided_slice %25 {offsets = [0, 76], sizes = [8, 4], strides = [1, 1]} : vector<8x96xf32> to vector<8x4xf32>
    %cst_39 = arith.constant dense<0.000000e+00> : vector<8x8xf32>
    %86 = tpu.matmul %83, %84, %cst_39 {dimension_numbers = #tpu.dot_dimension_numbers<[1], [1], [0], [0], [0, 0, 1, 0], [], []>} : vector<8x4xf32>, vector<8x4xf32>, vector<8x8xf32> -> vector<8x8xf32>
    %c0_40 = arith.constant 0 : index
    %c3 = arith.constant 3 : index
    %c0_41 = arith.constant 0 : index
    %c0_42 = arith.constant 0 : index
    %87 = vector.load %arg7[%c0_40, %c3, %c0_41, %c0_42] : memref<1x8x8x8xf32, #tpu.memory_space<vmem>>, vector<1x1x8x8xf32>
    %88 = vector.shape_cast %87 : vector<1x1x8x8xf32> to vector<8x8xf32>
    %89 = arith.addf %86, %88 : vector<8x8xf32>
    %cst_43 = arith.constant dense<0xFF800000> : vector<8xf32>
    %90 = vector.multi_reduction <maximumf>, %89, %cst_43 [1] : vector<8x8xf32> to vector<8xf32>
    %91 = vector.shape_cast %90 : vector<8xf32> to vector<8x1xf32>
    %92 = vector.broadcast %91 : vector<8x1xf32> to vector<8x8xf32>
    %93 = arith.subf %89, %92 : vector<8x8xf32>
    %94 = math.exp %93 : vector<8x8xf32>
    %cst_44 = arith.constant dense<0.000000e+00> : vector<8xf32>
    %95 = vector.multi_reduction <add>, %94, %cst_44 [1] : vector<8x8xf32> to vector<8xf32>
    %96 = vector.shape_cast %95 : vector<8xf32> to vector<8x1xf32>
    %97 = tpu.reciprocal %96 {approx = true} : vector<8x1xf32> -> vector<8x1xf32>
    %98 = vector.broadcast %97 : vector<8x1xf32> to vector<8x8xf32>
    %99 = arith.mulf %94, %98 : vector<8x8xf32>
    %cst_45 = arith.constant dense<0.000000e+00> : vector<8x4xf32>
    %100 = tpu.matmul %99, %85, %cst_45 {dimension_numbers = #tpu.dot_dimension_numbers<[1], [0], [0], [1], [0, 0, 1, 1], [], []>} : vector<8x8xf32>, vector<8x4xf32>, vector<8x4xf32> -> vector<8x4xf32>
    %c0_46 = arith.constant 0 : index
    %c12 = arith.constant 12 : index
    %101 = vector.load %arg9[%c0_46, %c12] : memref<8x32xf32, #tpu.memory_space<vmem>>, vector<8x4xf32>
    tpu.vector_store %arg9[%c0_46, %c12], %100 {strides = array<i32>} : memref<8x32xf32, #tpu.memory_space<vmem>>, vector<8x4xf32>,
    %102 = vector.extract_strided_slice %25 {offsets = [0, 16], sizes = [8, 4], strides = [1, 1]} : vector<8x96xf32> to vector<8x4xf32>
    %103 = vector.extract_strided_slice %25 {offsets = [0, 48], sizes = [8, 4], strides = [1, 1]} : vector<8x96xf32> to vector<8x4xf32>
    %104 = vector.extract_strided_slice %25 {offsets = [0, 80], sizes = [8, 4], strides = [1, 1]} : vector<8x96xf32> to vector<8x4xf32>
    %cst_47 = arith.constant dense<0.000000e+00> : vector<8x8xf32>
    %105 = tpu.matmul %102, %103, %cst_47 {dimension_numbers = #tpu.dot_dimension_numbers<[1], [1], [0], [0], [0, 0, 1, 0], [], []>} : vector<8x4xf32>, vector<8x4xf32>, vector<8x8xf32> -> vector<8x8xf32>
    %c0_48 = arith.constant 0 : index
    %c4_49 = arith.constant 4 : index
    %c0_50 = arith.constant 0 : index
    %c0_51 = arith.constant 0 : index
    %106 = vector.load %arg7[%c0_48, %c4_49, %c0_50, %c0_51] : memref<1x8x8x8xf32, #tpu.memory_space<vmem>>, vector<1x1x8x8xf32>
    %107 = vector.shape_cast %106 : vector<1x1x8x8xf32> to vector<8x8xf32>
    %108 = arith.addf %105, %107 : vector<8x8xf32>
    %cst_52 = arith.constant dense<0xFF800000> : vector<8xf32>
    %109 = vector.multi_reduction <maximumf>, %108, %cst_52 [1] : vector<8x8xf32> to vector<8xf32>
    %110 = vector.shape_cast %109 : vector<8xf32> to vector<8x1xf32>
    %111 = vector.broadcast %110 : vector<8x1xf32> to vector<8x8xf32>
    %112 = arith.subf %108, %111 : vector<8x8xf32>
    %113 = math.exp %112 : vector<8x8xf32>
    %cst_53 = arith.constant dense<0.000000e+00> : vector<8xf32>
    %114 = vector.multi_reduction <add>, %113, %cst_53 [1] : vector<8x8xf32> to vector<8xf32>
    %115 = vector.shape_cast %114 : vector<8xf32> to vector<8x1xf32>
    %116 = tpu.reciprocal %115 {approx = true} : vector<8x1xf32> -> vector<8x1xf32>
    %117 = vector.broadcast %116 : vector<8x1xf32> to vector<8x8xf32>
    %118 = arith.mulf %113, %117 : vector<8x8xf32>
    %cst_54 = arith.constant dense<0.000000e+00> : vector<8x4xf32>
    %119 = tpu.matmul %118, %104, %cst_54 {dimension_numbers = #tpu.dot_dimension_numbers<[1], [0], [0], [1], [0, 0, 1, 1], [], []>} : vector<8x8xf32>, vector<8x4xf32>, vector<8x4xf32> -> vector<8x4xf32>
    %c0_55 = arith.constant 0 : index
    %c16 = arith.constant 16 : index
    %120 = vector.load %arg9[%c0_55, %c16] : memref<8x32xf32, #tpu.memory_space<vmem>>, vector<8x4xf32>
    tpu.vector_store %arg9[%c0_55, %c16], %119 {strides = array<i32>} : memref<8x32xf32, #tpu.memory_space<vmem>>, vector<8x4xf32>,
    %121 = vector.extract_strided_slice %25 {offsets = [0, 20], sizes = [8, 4], strides = [1, 1]} : vector<8x96xf32> to vector<8x4xf32>
    %122 = vector.extract_strided_slice %25 {offsets = [0, 52], sizes = [8, 4], strides = [1, 1]} : vector<8x96xf32> to vector<8x4xf32>
    %123 = vector.extract_strided_slice %25 {offsets = [0, 84], sizes = [8, 4], strides = [1, 1]} : vector<8x96xf32> to vector<8x4xf32>
    %cst_56 = arith.constant dense<0.000000e+00> : vector<8x8xf32>
    %124 = tpu.matmul %121, %122, %cst_56 {dimension_numbers = #tpu.dot_dimension_numbers<[1], [1], [0], [0], [0, 0, 1, 0], [], []>} : vector<8x4xf32>, vector<8x4xf32>, vector<8x8xf32> -> vector<8x8xf32>
    %c0_57 = arith.constant 0 : index
    %c5 = arith.constant 5 : index
    %c0_58 = arith.constant 0 : index
    %c0_59 = arith.constant 0 : index
    %125 = vector.load %arg7[%c0_57, %c5, %c0_58, %c0_59] : memref<1x8x8x8xf32, #tpu.memory_space<vmem>>, vector<1x1x8x8xf32>
    %126 = vector.shape_cast %125 : vector<1x1x8x8xf32> to vector<8x8xf32>
    %127 = arith.addf %124, %126 : vector<8x8xf32>
    %cst_60 = arith.constant dense<0xFF800000> : vector<8xf32>
    %128 = vector.multi_reduction <maximumf>, %127, %cst_60 [1] : vector<8x8xf32> to vector<8xf32>
    %129 = vector.shape_cast %128 : vector<8xf32> to vector<8x1xf32>
    %130 = vector.broadcast %129 : vector<8x1xf32> to vector<8x8xf32>
    %131 = arith.subf %127, %130 : vector<8x8xf32>
    %132 = math.exp %131 : vector<8x8xf32>
    %cst_61 = arith.constant dense<0.000000e+00> : vector<8xf32>
    %133 = vector.multi_reduction <add>, %132, %cst_61 [1] : vector<8x8xf32> to vector<8xf32>
    %134 = vector.shape_cast %133 : vector<8xf32> to vector<8x1xf32>
    %135 = tpu.reciprocal %134 {approx = true} : vector<8x1xf32> -> vector<8x1xf32>
    %136 = vector.broadcast %135 : vector<8x1xf32> to vector<8x8xf32>
    %137 = arith.mulf %132, %136 : vector<8x8xf32>
    %cst_62 = arith.constant dense<0.000000e+00> : vector<8x4xf32>
    %138 = tpu.matmul %137, %123, %cst_62 {dimension_numbers = #tpu.dot_dimension_numbers<[1], [0], [0], [1], [0, 0, 1, 1], [], []>} : vector<8x8xf32>, vector<8x4xf32>, vector<8x4xf32> -> vector<8x4xf32>
    %c0_63 = arith.constant 0 : index
    %c20 = arith.constant 20 : index
    %139 = vector.load %arg9[%c0_63, %c20] : memref<8x32xf32, #tpu.memory_space<vmem>>, vector<8x4xf32>
    tpu.vector_store %arg9[%c0_63, %c20], %138 {strides = array<i32>} : memref<8x32xf32, #tpu.memory_space<vmem>>, vector<8x4xf32>,
    %140 = vector.extract_strided_slice %25 {offsets = [0, 24], sizes = [8, 4], strides = [1, 1]} : vector<8x96xf32> to vector<8x4xf32>
    %141 = vector.extract_strided_slice %25 {offsets = [0, 56], sizes = [8, 4], strides = [1, 1]} : vector<8x96xf32> to vector<8x4xf32>
    %142 = vector.extract_strided_slice %25 {offsets = [0, 88], sizes = [8, 4], strides = [1, 1]} : vector<8x96xf32> to vector<8x4xf32>
    %cst_64 = arith.constant dense<0.000000e+00> : vector<8x8xf32>
    %143 = tpu.matmul %140, %141, %cst_64 {dimension_numbers = #tpu.dot_dimension_numbers<[1], [1], [0], [0], [0, 0, 1, 0], [], []>} : vector<8x4xf32>, vector<8x4xf32>, vector<8x8xf32> -> vector<8x8xf32>
    %c0_65 = arith.constant 0 : index
    %c6 = arith.constant 6 : index
    %c0_66 = arith.constant 0 : index
    %c0_67 = arith.constant 0 : index
    %144 = vector.load %arg7[%c0_65, %c6, %c0_66, %c0_67] : memref<1x8x8x8xf32, #tpu.memory_space<vmem>>, vector<1x1x8x8xf32>
    %145 = vector.shape_cast %144 : vector<1x1x8x8xf32> to vector<8x8xf32>
    %146 = arith.addf %143, %145 : vector<8x8xf32>
    %cst_68 = arith.constant dense<0xFF800000> : vector<8xf32>
    %147 = vector.multi_reduction <maximumf>, %146, %cst_68 [1] : vector<8x8xf32> to vector<8xf32>
    %148 = vector.shape_cast %147 : vector<8xf32> to vector<8x1xf32>
    %149 = vector.broadcast %148 : vector<8x1xf32> to vector<8x8xf32>
    %150 = arith.subf %146, %149 : vector<8x8xf32>
    %151 = math.exp %150 : vector<8x8xf32>
    %cst_69 = arith.constant dense<0.000000e+00> : vector<8xf32>
    %152 = vector.multi_reduction <add>, %151, %cst_69 [1] : vector<8x8xf32> to vector<8xf32>
    %153 = vector.shape_cast %152 : vector<8xf32> to vector<8x1xf32>
    %154 = tpu.reciprocal %153 {approx = true} : vector<8x1xf32> -> vector<8x1xf32>
    %155 = vector.broadcast %154 : vector<8x1xf32> to vector<8x8xf32>
    %156 = arith.mulf %151, %155 : vector<8x8xf32>
    %cst_70 = arith.constant dense<0.000000e+00> : vector<8x4xf32>
    %157 = tpu.matmul %156, %142, %cst_70 {dimension_numbers = #tpu.dot_dimension_numbers<[1], [0], [0], [1], [0, 0, 1, 1], [], []>} : vector<8x8xf32>, vector<8x4xf32>, vector<8x4xf32> -> vector<8x4xf32>
    %c0_71 = arith.constant 0 : index
    %c24 = arith.constant 24 : index
    %158 = vector.load %arg9[%c0_71, %c24] : memref<8x32xf32, #tpu.memory_space<vmem>>, vector<8x4xf32>
    tpu.vector_store %arg9[%c0_71, %c24], %157 {strides = array<i32>} : memref<8x32xf32, #tpu.memory_space<vmem>>, vector<8x4xf32>,
    %159 = vector.extract_strided_slice %25 {offsets = [0, 28], sizes = [8, 4], strides = [1, 1]} : vector<8x96xf32> to vector<8x4xf32>
    %160 = vector.extract_strided_slice %25 {offsets = [0, 60], sizes = [8, 4], strides = [1, 1]} : vector<8x96xf32> to vector<8x4xf32>
    %161 = vector.extract_strided_slice %25 {offsets = [0, 92], sizes = [8, 4], strides = [1, 1]} : vector<8x96xf32> to vector<8x4xf32>
    %cst_72 = arith.constant dense<0.000000e+00> : vector<8x8xf32>
    %162 = tpu.matmul %159, %160, %cst_72 {dimension_numbers = #tpu.dot_dimension_numbers<[1], [1], [0], [0], [0, 0, 1, 0], [], []>} : vector<8x4xf32>, vector<8x4xf32>, vector<8x8xf32> -> vector<8x8xf32>
    %c0_73 = arith.constant 0 : index
    %c7 = arith.constant 7 : index
    %c0_74 = arith.constant 0 : index
    %c0_75 = arith.constant 0 : index
    %163 = vector.load %arg7[%c0_73, %c7, %c0_74, %c0_75] : memref<1x8x8x8xf32, #tpu.memory_space<vmem>>, vector<1x1x8x8xf32>
    %164 = vector.shape_cast %163 : vector<1x1x8x8xf32> to vector<8x8xf32>
    %165 = arith.addf %162, %164 : vector<8x8xf32>
    %cst_76 = arith.constant dense<0xFF800000> : vector<8xf32>
    %166 = vector.multi_reduction <maximumf>, %165, %cst_76 [1] : vector<8x8xf32> to vector<8xf32>
    %167 = vector.shape_cast %166 : vector<8xf32> to vector<8x1xf32>
    %168 = vector.broadcast %167 : vector<8x1xf32> to vector<8x8xf32>
    %169 = arith.subf %165, %168 : vector<8x8xf32>
    %170 = math.exp %169 : vector<8x8xf32>
    %cst_77 = arith.constant dense<0.000000e+00> : vector<8xf32>
    %171 = vector.multi_reduction <add>, %170, %cst_77 [1] : vector<8x8xf32> to vector<8xf32>
    %172 = vector.shape_cast %171 : vector<8xf32> to vector<8x1xf32>
    %173 = tpu.reciprocal %172 {approx = true} : vector<8x1xf32> -> vector<8x1xf32>
    %174 = vector.broadcast %173 : vector<8x1xf32> to vector<8x8xf32>
    %175 = arith.mulf %170, %174 : vector<8x8xf32>
    %cst_78 = arith.constant dense<0.000000e+00> : vector<8x4xf32>
    %176 = tpu.matmul %175, %161, %cst_78 {dimension_numbers = #tpu.dot_dimension_numbers<[1], [0], [0], [1], [0, 0, 1, 1], [], []>} : vector<8x8xf32>, vector<8x4xf32>, vector<8x4xf32> -> vector<8x4xf32>
    %c0_79 = arith.constant 0 : index
    %c28 = arith.constant 28 : index
    %177 = vector.load %arg9[%c0_79, %c28] : memref<8x32xf32, #tpu.memory_space<vmem>>, vector<8x4xf32>
    tpu.vector_store %arg9[%c0_79, %c28], %176 {strides = array<i32>} : memref<8x32xf32, #tpu.memory_space<vmem>>, vector<8x4xf32>,
    %c0_80 = arith.constant 0 : index
    %c0_81 = arith.constant 0 : index
    %178 = vector.load %arg9[%c0_80, %c0_81] : memref<8x32xf32, #tpu.memory_space<vmem>>, vector<8x32xf32>
    %c0_82 = arith.constant 0 : index
    %c0_83 = arith.constant 0 : index
    %179 = vector.load %arg5[%c0_82, %c0_83] : memref<32x32xf32, #tpu.memory_space<vmem>>, vector<32x32xf32>
    %cst_84 = arith.constant dense<0.000000e+00> : vector<8x32xf32>
    %180 = tpu.matmul %178, %179, %cst_84 {dimension_numbers = #tpu.dot_dimension_numbers<[1], [0], [0], [1], [0, 0, 1, 1], [], []>} : vector<8x32xf32>, vector<32x32xf32>, vector<8x32xf32> -> vector<8x32xf32>
    %c0_85 = arith.constant 0 : index
    %c0_86 = arith.constant 0 : index
    %181 = vector.load %arg6[%c0_85, %c0_86] : memref<1x32xf32, #tpu.memory_space<vmem>>, vector<1x32xf32>
    %182 = vector.broadcast %181 : vector<1x32xf32> to vector<8x32xf32>
    %183 = arith.addf %180, %182 : vector<8x32xf32>
    %c0_87 = arith.constant 0 : index
    %c0_88 = arith.constant 0 : index
    %c0_89 = arith.constant 0 : index
    %184 = vector.load %arg8[%c0_87, %c0_88, %c0_89] : memref<1x8x32xf32, #tpu.memory_space<vmem>>, vector<1x8x32xf32>
    %185 = vector.shape_cast %184 : vector<1x8x32xf32> to vector<8x32xf32>
    %186 = vector.shape_cast %183 : vector<8x32xf32> to vector<1x8x32xf32>
    tpu.vector_store %arg8[%c0_87, %c0_88, %c0_89], %186 {strides = array<i32>} : memref<1x8x32xf32, #tpu.memory_space<vmem>>, vector<1x8x32xf32>,
    return
  }
  func.func @transform_0(%arg0: i32) -> (i32, i32, i32) {
    %c0_i32 = arith.constant 0 : i32
    %c0_i32_0 = arith.constant 0 : i32
    %c0_i32_1 = arith.constant 0 : i32
    return %arg0, %c0_i32, %c0_i32_0 : i32, i32, i32
  }
  func.func @transform_1(%arg0: i32) -> (i32, i32) {
    %c0_i32 = arith.constant 0 : i32
    %c0_i32_0 = arith.constant 0 : i32
    %c0_i32_1 = arith.constant 0 : i32
    return %c0_i32, %c0_i32_0 : i32, i32
  }
  func.func @transform_2(%arg0: i32) -> (i32, i32) {
    %c0_i32 = arith.constant 0 : i32
    %c0_i32_0 = arith.constant 0 : i32
    %c0_i32_1 = arith.constant 0 : i32
    return %c0_i32, %c0_i32_0 : i32, i32
  }
  func.func @transform_3(%arg0: i32) -> (i32, i32) {
    %c0_i32 = arith.constant 0 : i32
    %c0_i32_0 = arith.constant 0 : i32
    %c0_i32_1 = arith.constant 0 : i32
    return %c0_i32, %c0_i32_0 : i32, i32
  }
  func.func @transform_4(%arg0: i32) -> (i32, i32) {
    %c0_i32 = arith.constant 0 : i32
    %c0_i32_0 = arith.constant 0 : i32
    %c0_i32_1 = arith.constant 0 : i32
    return %c0_i32, %c0_i32_0 : i32, i32
  }
  func.func @transform_5(%arg0: i32) -> (i32, i32) {
    %c0_i32 = arith.constant 0 : i32
    %c0_i32_0 = arith.constant 0 : i32
    %c0_i32_1 = arith.constant 0 : i32
    return %c0_i32, %c0_i32_0 : i32, i32
  }
  func.func @transform_6(%arg0: i32) -> (i32, i32, i32, i32) {
    %c0_i32 = arith.constant 0 : i32
    %c0_i32_0 = arith.constant 0 : i32
    %c0_i32_1 = arith.constant 0 : i32
    %c0_i32_2 = arith.constant 0 : i32
    return %arg0, %c0_i32, %c0_i32_0, %c0_i32_1 : i32, i32, i32, i32
  }
  func.func @transform_7(%arg0: i32) -> (i32, i32, i32) {
    %c0_i32 = arith.constant 0 : i32
    %c0_i32_0 = arith.constant 0 : i32
    %c0_i32_1 = arith.constant 0 : i32
    return %arg0, %c0_i32, %c0_i32_0 : i32, i32, i32
  }
}

</mosaic_0001>

<llo_original>
// kernel: tpu_custom_call.1
$region0: #{tpu_custom_call.1}
  #allocation0 [shape = 'u32[]', space=smem, size = 0x4, offset = 0x4, fixed_abs, tag = 'smem constant byte address 0x4 - core index']
  #allocation1 [shape = 'u32[144,128]{1,0:T(1,128)}', space=vmem, size = 0x12000, scoped, tag = 'internal scratch']
  #allocation2 [shape = 'f32[8,32]{1,0:T(8,128)}', space=vmem, size = 0x1000, scoped, tag = 'scratch operand']
  %s0 = inlined_call_operand.hbm [shape: f32[2,8,32], index: 0, kind: input, shape index: {}]
  %s1 = inlined_call_operand.vmem [shape: f32[1,32], index: 1, kind: input, shape index: {}]
  %s2 = inlined_call_operand.vmem [shape: f32[1,32], index: 2, kind: input, shape index: {}]
  %s3 = inlined_call_operand.hbm [shape: f32[32,96], index: 3, kind: input, shape index: {}]
  %s4 = inlined_call_operand.hbm [shape: f32[32,32], index: 4, kind: input, shape index: {}]
  %s5 = inlined_call_operand.vmem [shape: f32[1,32], index: 5, kind: input, shape index: {}]
  %s6 = inlined_call_operand.hbm [shape: f32[2,8,8,8], index: 6, kind: input, shape index: {}]
  %s7 = inlined_call_operand.hbm [shape: f32[2,8,32], index: 7, kind: output, shape index: {}]
  %s8 = sld [smem:[#allocation0]]
  $region77: #{tpu_custom_call.1} parent=0
    _
  %s10 = ssub.s32 1, %s8
  %s11 = scalar_select 0, %s10, %s8
  $region1: #{tpu_custom_call.1} parent=0
    #allocation3 [shape = 'u8[8192]{0}', space=vmem, size = 0x2000, scoped, tag = 'input window, operand 0']
    #allocation4 [shape = 's32[2]{0}', space=sflag, size = 0x8, scoped, tag = 'scoped memory for tpu_custom_call.1']
    #allocation5 [shape = 's32[2]{0}', space=sflag, size = 0x8, scoped, tag = 'scoped memory for tpu_custom_call.1']
    #allocation6 [shape = 'u8[16384]{0}', space=vmem, size = 0x4000, scoped, tag = 'input window, operand 3, single buffered']
    #allocation7 [shape = 's32[1]{0}', space=sflag, size = 0x4, scoped, tag = 'scoped memory for tpu_custom_call.1']
    #allocation8 [shape = 'u8[16384]{0}', space=vmem, size = 0x4000, scoped, tag = 'input window, operand 4, single buffered']
    #allocation9 [shape = 'u8[65536]{0}', space=vmem, size = 0x10000, scoped, tag = 'input window, operand 6']
    #allocation10 [shape = 's32[2]{0}', space=sflag, size = 0x8, scoped, tag = 'scoped memory for tpu_custom_call.1']
    #allocation11 [shape = 'u8[8192]{0}', space=vmem, size = 0x2000, scoped, tag = 'output window, operand 0']
    %12 = vsyncpa [#allocation4], 0
    %s13 = scalar_lea.sflag [#allocation4], 1
    %14 = vsyncpa %s13, 0
    %15 = vsyncpa [#allocation7], 0
    %16 = vsyncpa [#allocation10], 0
    %s17 = scalar_lea.sflag [#allocation10], 1
    %18 = vsyncpa %s17, 0
    %19 = vsyncpa [#allocation5], 0
    %s20 = scalar_lea.sflag [#allocation5], 1
    %21 = vsyncpa %s20, 0
    loop: start=0, step=1, limit=4
    $region2: #{tpu_custom_call.1} parent=1 // loop_pre_header
      _
    $region3: #{tpu_custom_call.1} parent=1 // loop_header
      %s23 = sphi 0, %s27
      %p24 = scmp.ge.s32.totalorder %s23, 4
      %s33 = sphi 0, %s35
      %s36 = sphi 0, %s33
      %s37 = sphi 0, %s36
      %s53 = sphi 0, %s37
      %s57 = sphi 0, %s57
      %s59 = sphi 0, %s57
      %s60 = sphi 0, %s59
      %s74 = sphi 0, %s60
      %s78 = sphi 0, %s78
      %s80 = sphi 0, %s78
      %s81 = sphi 0, %s80
      %s95 = sphi 0, %s81
      %s99 = sphi 0, %s99
      %s101 = sphi 0, %s99
      %s102 = sphi 0, %s101
      %s116 = sphi 0, %s102
      %s120 = sphi 0, %s120
      %s122 = sphi 0, %s120
      %s123 = sphi 0, %s122
      %s137 = sphi 0, %s123
      %s141 = sphi 0, %s141
      %s143 = sphi 0, %s141
      %s144 = sphi 0, %s143
      %s158 = sphi 0, %s144
      %s164 = sphi 0, %s166
      %s167 = sphi 0, %s164
      %s168 = sphi 0, %s167
      %s184 = sphi 0, %s168
      %s190 = sphi 0, %s192
      %s193 = sphi 0, %s190
      %s194 = sphi 0, %s193
      %s210 = sphi 0, %s194
    $region4: #{tpu_custom_call.1} parent=1 // loop_header_branch
      %26 = sbr.rel (%p24) target = $region8
    $region5: #{tpu_custom_call.1} parent=1 // loop_body
      %s28 = ssub.s32 %s23, 1
      %s29 = ssub.s32 %s23, 2
      %s30 = sadd.s32 %s23, 1
      %s31 = ssub.s32 %s23, %s30
      %p32 = scmp.eq.s32.totalorder %s31, 0
      %s34 = sadd.s32 %s33, 1
      %s35 = scalar_select %p32, %s33, %s34
      %p38 = pneg %p32
      %p39 = scmp.eq.s32.totalorder %s23, 1
      %p40 = por %p38, %p39
      %p41 = scmp.ne.s32.totalorder %s33, %s36
      %p42 = scmp.eq.s32.totalorder %s23, 0
      %p43 = por %p41, %p42
      %p44 = scmp.ne.s32.totalorder %s33, %s36
      %p45 = scmp.eq.s32.totalorder %s28, 1
      %p46 = por %p44, %p45
      %p47 = scmp.ne.s32.totalorder %s36, %s37
      %p48 = scmp.eq.s32.totalorder %s28, 0
      %p49 = por %p47, %p48
      %p50 = scmp.ne.s32.totalorder %s36, %s37
      %p51 = scmp.eq.s32.totalorder %s29, 1
      %p52 = por %p50, %p51
      %p54 = scmp.ne.s32.totalorder %s37, %s53
      %p55 = scmp.eq.s32.totalorder %s29, 0
      %p56 = por %p54, %p55
      %s58 = sadd.s32 %s57, 1
      %p61 = scmp.eq.s32.totalorder %s23, 1
      %p62 = scmp.ne.s32.totalorder %s57, %s59
      %p63 = scmp.eq.s32.totalorder %s23, 0
      %p64 = por %p62, %p63
      %p65 = scmp.ne.s32.totalorder %s57, %s59
      %p66 = scmp.eq.s32.totalorder %s28, 1
      %p67 = por %p65, %p66
      %p68 = scmp.ne.s32.totalorder %s59, %s60
      %p69 = scmp.eq.s32.totalorder %s28, 0
      %p70 = por %p68, %p69
      %p71 = scmp.ne.s32.totalorder %s59, %s60
      %p72 = scmp.eq.s32.totalorder %s29, 1
      %p73 = por %p71, %p72
      %p75 = scmp.ne.s32.totalorder %s60, %s74
      %p76 = scmp.eq.s32.totalorder %s29, 0
      %p77 = por %p75, %p76
      %s79 = sadd.s32 %s78, 1
      %p82 = scmp.eq.s32.totalorder %s23, 1
      %p83 = scmp.ne.s32.totalorder %s78, %s80
      %p84 = scmp.eq.s32.totalorder %s23, 0
      %p85 = por %p83, %p84
      %p86 = scmp.ne.s32.totalorder %s78, %s80
      %p87 = scmp.eq.s32.totalorder %s28, 1
      %p88 = por %p86, %p87
      %p89 = scmp.ne.s32.totalorder %s80, %s81
      %p90 = scmp.eq.s32.totalorder %s28, 0
      %p91 = por %p89, %p90
      %p92 = scmp.ne.s32.totalorder %s80, %s81
      %p93 = scmp.eq.s32.totalorder %s29, 1
      %p94 = por %p92, %p93
      %p96 = scmp.ne.s32.totalorder %s81, %s95
      %p97 = scmp.eq.s32.totalorder %s29, 0
      %p98 = por %p96, %p97
      %s100 = sadd.s32 %s99, 1
      %p103 = scmp.eq.s32.totalorder %s23, 1
      %p104 = scmp.ne.s32.totalorder %s99, %s101
      %p105 = scmp.eq.s32.totalorder %s23, 0
      %p106 = por %p104, %p105
      %p107 = scmp.ne.s32.totalorder %s99, %s101
      %p108 = scmp.eq.s32.totalorder %s28, 1
      %p109 = por %p107, %p108
      %p110 = scmp.ne.s32.totalorder %s101, %s102
      %p111 = scmp.eq.s32.totalorder %s28, 0
      %p112 = por %p110, %p111
      %p113 = scmp.ne.s32.totalorder %s101, %s102
      %p114 = scmp.eq.s32.totalorder %s29, 1
      %p115 = por %p113, %p114
      %p117 = scmp.ne.s32.totalorder %s102, %s116
      %p118 = scmp.eq.s32.totalorder %s29, 0
      %p119 = por %p117, %p118
      %s121 = sadd.s32 %s120, 1
      %p124 = scmp.eq.s32.totalorder %s23, 1
      %p125 = scmp.ne.s32.totalorder %s120, %s122
      %p126 = scmp.eq.s32.totalorder %s23, 0
      %p127 = por %p125, %p126
      %p128 = scmp.ne.s32.totalorder %s120, %s122
      %p129 = scmp.eq.s32.totalorder %s28, 1
      %p130 = por %p128, %p129
      %p131 = scmp.ne.s32.totalorder %s122, %s123
      %p132 = scmp.eq.s32.totalorder %s28, 0
      %p133 = por %p131, %p132
      %p134 = scmp.ne.s32.totalorder %s122, %s123
      %p135 = scmp.eq.s32.totalorder %s29, 1
      %p136 = por %p134, %p135
      %p138 = scmp.ne.s32.totalorder %s123, %s137
      %p139 = scmp.eq.s32.totalorder %s29, 0
      %p140 = por %p138, %p139
      %s142 = sadd.s32 %s141, 1
      %p145 = scmp.eq.s32.totalorder %s23, 1
      %p146 = scmp.ne.s32.totalorder %s141, %s143
      %p147 = scmp.eq.s32.totalorder %s23, 0
      %p148 = por %p146, %p147
      %p149 = scmp.ne.s32.totalorder %s141, %s143
      %p150 = scmp.eq.s32.totalorder %s28, 1
      %p151 = por %p149, %p150
      %p152 = scmp.ne.s32.totalorder %s143, %s144
      %p153 = scmp.eq.s32.totalorder %s28, 0
      %p154 = por %p152, %p153
      %p155 = scmp.ne.s32.totalorder %s143, %s144
      %p156 = scmp.eq.s32.totalorder %s29, 1
      %p157 = por %p155, %p156
      %p159 = scmp.ne.s32.totalorder %s144, %s158
      %p160 = scmp.eq.s32.totalorder %s29, 0
      %p161 = por %p159, %p160
      %s162 = ssub.s32 %s23, %s30
      %p163 = scmp.eq.s32.totalorder %s162, 0
      %s165 = sadd.s32 %s164, 1
      %s166 = scalar_select %p163, %s164, %s165
      %p169 = pneg %p163
      %p170 = scmp.eq.s32.totalorder %s23, 1
      %p171 = por %p169, %p170
      %p172 = scmp.ne.s32.totalorder %s164, %s167
      %p173 = scmp.eq.s32.totalorder %s23, 0
      %p174 = por %p172, %p173
      %p175 = scmp.ne.s32.totalorder %s164, %s167
      %p176 = scmp.eq.s32.totalorder %s28, 1
      %p177 = por %p175, %p176
      %p178 = scmp.ne.s32.totalorder %s167, %s168
      %p179 = scmp.eq.s32.totalorder %s28, 0
      %p180 = por %p178, %p179
      %p181 = scmp.ne.s32.totalorder %s167, %s168
      %p182 = scmp.eq.s32.totalorder %s29, 1
      %p183 = por %p181, %p182
      %p185 = scmp.ne.s32.totalorder %s168, %s184
      %p186 = scmp.eq.s32.totalorder %s29, 0
      %p187 = por %p185, %p186
      %s188 = ssub.s32 %s23, %s30
      %p189 = scmp.eq.s32.totalorder %s188, 0
      %s191 = sadd.s32 %s190, 1
      %s192 = scalar_select %p189, %s190, %s191
      %p195 = pneg %p189
      %p196 = scmp.eq.s32.totalorder %s23, 1
      %p197 = por %p195, %p196
      %p198 = scmp.ne.s32.totalorder %s190, %s193
      %p199 = scmp.eq.s32.totalorder %s23, 0
      %p200 = por %p198, %p199
      %p201 = scmp.ne.s32.totalorder %s190, %s193
      %p202 = scmp.eq.s32.totalorder %s28, 1
      %p203 = por %p201, %p202
      %p204 = scmp.ne.s32.totalorder %s193, %s194
      %p205 = scmp.eq.s32.totalorder %s28, 0
      %p206 = por %p204, %p205
      %p207 = scmp.ne.s32.totalorder %s193, %s194
      %p208 = scmp.eq.s32.totalorder %s29, 1
      %p209 = por %p207, %p208
      %p211 = scmp.ne.s32.totalorder %s194, %s210
      %p212 = scmp.eq.s32.totalorder %s29, 0
      %p213 = por %p211, %p212
      %p214 = scmp.le.s32.totalorder 1, %s23
      %p215 = scmp.lt.s32.totalorder %s23, 3
      %p216 = pnand %p214, %p215
      %p217 = pneg %p216
      // Predicated region
      $region9: #{tpu_custom_call.1} parent=5 // pred_check
        _
      $region10: #{tpu_custom_call.1} parent=5 // pred_check_branch
        %219 = sbr.rel (%p216) target = $region12
      $region11: #{tpu_custom_call.1} parent=5 // pred_region
        %s220 = ssub.s32 %s23, 1
        // Predicated region
        $region13: #{tpu_custom_call.1} parent=11 // pred_check
          %p221 = pneg %p70
        $region14: #{tpu_custom_call.1} parent=11 // pred_check_branch
          %223 = sbr.rel (%p221) target = $region16
        $region15: #{tpu_custom_call.1} parent=11 // pred_region
          _
        $region16: #{tpu_custom_call.1} parent=11 // pred_fallthru
          _
        // Predicated region
        $region17: #{tpu_custom_call.1} parent=11 // pred_check
          %p224 = pneg %p91
        $region18: #{tpu_custom_call.1} parent=11 // pred_check_branch
          %226 = sbr.rel (%p224) target = $region20
        $region19: #{tpu_custom_call.1} parent=11 // pred_region
          _
        $region20: #{tpu_custom_call.1} parent=11 // pred_fallthru
          _
        // Predicated region
        $region21: #{tpu_custom_call.1} parent=11 // pred_check
          %p227 = pneg %p112
        $region22: #{tpu_custom_call.1} parent=11 // pred_check_branch
          %229 = sbr.rel (%p227) target = $region24
        $region23: #{tpu_custom_call.1} parent=11 // pred_region
          %s231 = ssub.s32 512, 512
          %232 = vsyncadd [#allocation7], %s231
          %s233 = sshll.u32 [#allocation6], 4
          %s234 = int_to_ptr.vmem [resolvable:$true] %s233
          %239 = dma.hbm_to_vmem [thread:$0]  %s3, 512, %s234, [#allocation7], 128, 128, 8
        $region24: #{tpu_custom_call.1} parent=11 // pred_fallthru
          _
        // Predicated region
        $region25: #{tpu_custom_call.1} parent=11 // pred_check
          %p240 = pneg %p133
        $region26: #{tpu_custom_call.1} parent=11 // pred_check_branch
          %242 = sbr.rel (%p240) target = $region28
        $region27: #{tpu_custom_call.1} parent=11 // pred_region
          %s244 = ssub.s32 512, 512
          %245 = vsyncadd [#allocation7], %s244
          %s246 = sshll.u32 [#allocation8], 4
          %s247 = int_to_ptr.vmem [resolvable:$true] %s246
          %252 = dma.hbm_to_vmem [thread:$0]  %s4, 512, %s247, [#allocation7], 128, 128, 8
        $region28: #{tpu_custom_call.1} parent=11 // pred_fallthru
          _
        // Predicated region
        $region29: #{tpu_custom_call.1} parent=11 // pred_check
          %p253 = pneg %p154
        $region30: #{tpu_custom_call.1} parent=11 // pred_check_branch
          %255 = sbr.rel (%p253) target = $region32
        $region31: #{tpu_custom_call.1} parent=11 // pred_region
          _
        $region32: #{tpu_custom_call.1} parent=11 // pred_fallthru
          _
      $region12: #{tpu_custom_call.1} parent=5 // pred_fallthru
        _
      %p256 = scmp.lt.s32.totalorder %s23, 2
      // Predicated region
      $region33: #{tpu_custom_call.1} parent=5 // pred_check
        %p257 = pneg %p256
      $region34: #{tpu_custom_call.1} parent=5 // pred_check_branch
        %259 = sbr.rel (%p257) target = $region36
      $region35: #{tpu_custom_call.1} parent=5 // pred_region
        // Predicated region
        $region37: #{tpu_custom_call.1} parent=35 // pred_check
          %p260 = pneg %p43
        $region38: #{tpu_custom_call.1} parent=35 // pred_check_branch
          %262 = sbr.rel (%p260) target = $region40
        $region39: #{tpu_custom_call.1} parent=35 // pred_region
          %s263 = sand.u32 %s33, 1
          %s264 = scalar_lea.sflag [#allocation4], %s263
          %s265 = sand.u32 %s33, 1
          %s266 = smul.addr %s265, 8
          %s267 = scalar_lea.vmem [#allocation3], %s266
          %s269 = ssub.s32 128, 128
          %270 = vsyncadd %s264, %s269
          %s271 = smul.addr %s23, 128
          %s272 = scalar_lea.hbm %s0, %s271
          %s274 = sshll.u32 %s267, 4
          %s275 = int_to_ptr.vmem [resolvable:$true] %s274
          %277 = dma.hbm_to_vmem [thread:$0]  %s272, 128, %s275, %s264
        $region40: #{tpu_custom_call.1} parent=35 // pred_fallthru
          _
        // Predicated region
        $region41: #{tpu_custom_call.1} parent=35 // pred_check
          %p278 = pneg %p174
        $region42: #{tpu_custom_call.1} parent=35 // pred_check_branch
          %280 = sbr.rel (%p278) target = $region44
        $region43: #{tpu_custom_call.1} parent=35 // pred_region
          %s281 = sand.u32 %s164, 1
          %s282 = scalar_lea.sflag [#allocation10], %s281
          %s283 = sand.u32 %s164, 1
          %s284 = smul.addr %s283, 64
          %s285 = scalar_lea.vmem [#allocation9], %s284
          %s287 = ssub.s32 1024, 1024
          %288 = vsyncadd %s282, %s287
          %s289 = smul.addr %s23, 8
          %s290 = smul.addr %s289, 128
          %s291 = scalar_lea.hbm %s6, %s290
          %s292 = sshll.u32 %s285, 4
          %s293 = int_to_ptr.vmem [resolvable:$true] %s292
          %298 = dma.hbm_to_vmem [thread:$0]  %s291, 1024, %s293, %s282, 128, 128, 8
        $region44: #{tpu_custom_call.1} parent=35 // pred_fallthru
          _
      $region36: #{tpu_custom_call.1} parent=5 // pred_fallthru
        _
      %p299 = scmp.le.s32.totalorder 1, %s23
      %p300 = scmp.lt.s32.totalorder %s23, 3
      %p301 = pnand %p299, %p300
      %p302 = pneg %p301
      // Predicated region
      $region45: #{tpu_custom_call.1} parent=5 // pred_check
        _
      $region46: #{tpu_custom_call.1} parent=5 // pred_check_branch
        %304 = sbr.rel (%p301) target = $region48
      $region47: #{tpu_custom_call.1} parent=5 // pred_region
        %s305 = ssub.s32 %s23, 1
        %s306 = sand.u32 %s36, 1
        %s307 = scalar_lea.sflag [#allocation4], %s306
        %s308 = sand.u32 %s36, 1
        %s309 = smul.addr %s308, 8
        %s310 = scalar_lea.vmem [#allocation3], %s309
        // Predicated region
        $region49: #{tpu_custom_call.1} parent=47 // pred_check
          %p311 = pneg %p49
        $region50: #{tpu_custom_call.1} parent=47 // pred_check_branch
          %313 = sbr.rel (%p311) target = $region52
        $region51: #{tpu_custom_call.1} parent=47 // pred_region
          %314 = dma.done %s307, 128
        $region52: #{tpu_custom_call.1} parent=47 // pred_fallthru
          _
        // Predicated region
        $region53: #{tpu_custom_call.1} parent=47 // pred_check
          %p315 = pneg %p112
        $region54: #{tpu_custom_call.1} parent=47 // pred_check_branch
          %317 = sbr.rel (%p315) target = $region56
        $region55: #{tpu_custom_call.1} parent=47 // pred_region
          %318 = dma.done [#allocation7], 512
        $region56: #{tpu_custom_call.1} parent=47 // pred_fallthru
          _
        // Predicated region
        $region57: #{tpu_custom_call.1} parent=47 // pred_check
          %p319 = pneg %p133
        $region58: #{tpu_custom_call.1} parent=47 // pred_check_branch
          %321 = sbr.rel (%p319) target = $region60
        $region59: #{tpu_custom_call.1} parent=47 // pred_region
          %322 = dma.done [#allocation7], 512
        $region60: #{tpu_custom_call.1} parent=47 // pred_fallthru
          _
        %s323 = sand.u32 %s167, 1
        %s324 = scalar_lea.sflag [#allocation10], %s323
        %s325 = sand.u32 %s167, 1
        %s326 = smul.addr %s325, 64
        %s327 = scalar_lea.vmem [#allocation9], %s326
        // Predicated region
        $region61: #{tpu_custom_call.1} parent=47 // pred_check
          %p328 = pneg %p180
        $region62: #{tpu_custom_call.1} parent=47 // pred_check_branch
          %330 = sbr.rel (%p328) target = $region64
        $region63: #{tpu_custom_call.1} parent=47 // pred_region
          %331 = dma.done %s324, 1024
        $region64: #{tpu_custom_call.1} parent=47 // pred_fallthru
          _
        %s332 = sand.u32 %s36, 1
        %s333 = scalar_lea.sflag [#allocation4], %s332
        %s334 = sand.u32 %s36, 1
        %s335 = smul.addr %s334, 8
        %s336 = scalar_lea.vmem [#allocation3], %s335
        %p337 = pneg %p49
        %p338 = pneg %p46
        %p339 = pneg %p70
        %p340 = pneg %p67
        %p341 = pneg %p91
        %p342 = pneg %p88
        %p343 = pneg %p112
        %p344 = pneg %p109
        %p345 = pneg %p133
        %p346 = pneg %p130
        %p347 = pneg %p154
        %p348 = pneg %p151
        %s349 = sand.u32 %s167, 1
        %s350 = scalar_lea.sflag [#allocation10], %s349
        %s351 = sand.u32 %s167, 1
        %s352 = smul.addr %s351, 64
        %s353 = scalar_lea.vmem [#allocation9], %s352
        %p354 = pneg %p180
        %p355 = pneg %p177
        %p356 = pneg %p206
        %p357 = pneg %p203
        %s358 = sand.u32 %s193, 1
        %s359 = scalar_lea.sflag [#allocation5], %s358
        %s360 = sand.u32 %s193, 1
        %s361 = smul.addr %s360, 8
        %s362 = scalar_lea.vmem [#allocation11], %s361
        %v363 = vld [vmem:[%s310] sm:$0xff]
        %vm364 = vcmask 261120
        %v365 = vsel %vm364, %v363, 0.0
        %366 = vadd.xlane.f32.xlu0 %v365
        %v367 = vpop.xlane.xlu0 %366
        %v368 = vrcp.pop 32.0
        %v369 = vmul.f32 %v367, %v368
        %v370 = vsub.f32 %v363, %v369
        %v371 = vmul.f32 %v370, %v370
        %v372 = vsel %vm364, %v371, 0.0
        %373 = vadd.xlane.f32.xlu0 %v372
        %v374 = vpop.xlane.xlu0 %373
        %v375 = vmul.f32 %v374, %v368
        %v376 = vadd.f32 %v375, 1e-05
        %v377 = vrsqrt.pop %v376
        %v378 = vmul.f32 %v370, %v377
        %v379 = vld [vmem:[%s1] sm:$0x1]
        %v381 = vlaneseq
        %v382 = vshrl.u32 %v381, 7
        %v383 = vsub.s32 0, %v382
        %v384 = vrot.slane %v379, %v383
        %v386 = vmul.f32 %v378, %v384
        %v387 = vld [vmem:[%s2] sm:$0x1]
        %v389 = vlaneseq
        %v390 = vshrl.u32 %v389, 7
        %v391 = vsub.s32 0, %v390
        %v392 = vrot.slane %v387, %v391
        %v394 = vadd.f32 %v386, %v392
        %v395 = vld [vmem:[#allocation6] sm:$0xff]
        %v396 = vld [vmem:[#allocation6 + $0x8] sm:$0xff]
        %v397 = vld [vmem:[#allocation6 + $0x10] sm:$0xff]
        %v398 = vld [vmem:[#allocation6 + $0x18] sm:$0xff]
        %v400 = vsel %vm364, %v394, 0
        %402 = vmatprep.subr.mxu0 0.0
        %403 = vmatpush1.msra.mxu0 0.0
        %404 = vmatprep.subr.mxu0 0.0
        %405 = vmatpush1.msra.mxu0 0.0
        %406 = vmatprep.subr.mxu0 0.0
        %407 = vmatpush1.msra.mxu0 0.0
        %408 = vmatprep.subr.mxu0 0.0
        %409 = vmatpush1.msra.mxu0 0.0
        %410 = vmatprep.subr.mxu0 0.0
        %411 = vmatpush1.msra.mxu0 0.0
        %412 = vmatprep.subr.mxu0 0.0
        %413 = vmatpush1.msra.mxu0 0.0
        %414 = vmatprep.subr.mxu0 0.0
        %415 = vmatpush1.msra.mxu0 0.0
        %416 = vmatprep.subr.mxu0 0.0
        %417 = vmatpush1.msra.mxu0 0.0
        %418 = vmatprep.subr.mxu0 0.0
        %419 = vmatpush1.msra.mxu0 0.0
        %420 = vmatprep.subr.mxu0 0.0
        %421 = vmatpush1.msra.mxu0 0.0
        %422 = vmatprep.subr.mxu0 0.0
        %423 = vmatpush1.msra.mxu0 0.0
        %424 = vmatprep.subr.mxu0 0.0
        %425 = vmatpush1.msra.mxu0 0.0
        %426 = vmatprep.subr.mxu0 0.0
        %427 = vmatpush1.msra.mxu0 %v398
        %428 = vmatprep.subr.mxu0 0.0
        %429 = vmatpush1.msra.mxu0 %v397
        %430 = vmatprep.subr.mxu0 0.0
        %431 = vmatpush1.msra.mxu0 %v396
        %432 = vmatprep.subr.mxu0 0.0
        %433 = vmatpush1.msra.mxu0 %v395
        %434 = vmatprep.subr.mxu0 0.0
        %435 = vmatpush2.msra.mxu0 0.0
        %436 = vmatprep.subr.mxu0 0.0
        %437 = vmatpush2.msra.mxu0 0.0
        %438 = vmatprep.subr.mxu0 0.0
        %439 = vmatpush2.msra.mxu0 0.0
        %440 = vmatprep.subr.mxu0 0.0
        %441 = vmatpush2.msra.mxu0 0.0
        %442 = vmatprep.subr.mxu0 0.0
        %443 = vmatpush2.msra.mxu0 0.0
        %444 = vmatprep.subr.mxu0 0.0
        %445 = vmatpush2.msra.mxu0 0.0
        %446 = vmatprep.subr.mxu0 0.0
        %447 = vmatpush2.msra.mxu0 0.0
        %448 = vmatprep.subr.mxu0 0.0
        %449 = vmatpush2.msra.mxu0 0.0
        %450 = vmatprep.subr.mxu0 0.0
        %451 = vmatpush2.msra.mxu0 0.0
        %452 = vmatprep.subr.mxu0 0.0
        %453 = vmatpush2.msra.mxu0 0.0
        %454 = vmatprep.subr.mxu0 0.0
        %455 = vmatpush2.msra.mxu0 0.0
        %456 = vmatprep.subr.mxu0 0.0
        %457 = vmatpush2.msra.mxu0 0.0
        %458 = vmatprep.subr.mxu0 0.0
        %459 = vmatpush2.msra.mxu0 0.0
        %460 = vmatprep.subr.mxu0 0.0
        %461 = vmatpush2.msra.mxu0 0.0
        %462 = vmatprep.subr.mxu0 0.0
        %463 = vmatpush2.msra.mxu0 0.0
        %464 = vmatprep.subr.mxu0 0.0
        %465 = vmatpush2.msra.mxu0 0.0
        %466 = vmatprep.mubr.f32.mxu0 0.0
        %467 = vmatmul.mubr.f32.gmra.mxu0 %v400
        %v468 = vpop.f32.mrf.mxu0
        %v469 = vadd.f32 0.0, %v468
        %v470 = vpop.f32.mrf.mxu0
        %471 = vdwg.mxu0
        %v472 = vld [vmem:[%s327] sm:$0xff]
        %474 = vrot.lane.b32.xlu0 %v469, 96
        %v475 = vpop.permute.xlu0 %474
        %vm476 = vcmask 31744
        %v477 = vsel %vm476, %v469, 0
        %v479 = vsel %vm476, %v475, 0
        %481 = vmatprep.subr.mxu0 0.0
        %482 = vmatpush1.xpose.msra.mxu0 0.0
        %483 = vmatprep.subr.mxu0 0.0
        %484 = vmatpush1.xpose.msra.mxu0 0.0
        %485 = vmatprep.subr.mxu0 0.0
        %486 = vmatpush1.xpose.msra.mxu0 0.0
        %487 = vmatprep.subr.mxu0 0.0
        %488 = vmatpush1.xpose.msra.mxu0 0.0
        %489 = vmatprep.subr.mxu0 0.0
        %490 = vmatpush1.xpose.msra.mxu0 0.0
        %491 = vmatprep.subr.mxu0 0.0
        %492 = vmatpush1.xpose.msra.mxu0 0.0
        %493 = vmatprep.subr.mxu0 0.0
        %494 = vmatpush1.xpose.msra.mxu0 0.0
        %495 = vmatprep.subr.mxu0 0.0
        %496 = vmatpush1.xpose.msra.mxu0 0.0
        %497 = vmatprep.subr.mxu0 0.0
        %498 = vmatpush1.xpose.msra.mxu0 0.0
        %499 = vmatprep.subr.mxu0 0.0
        %500 = vmatpush1.xpose.msra.mxu0 0.0
        %501 = vmatprep.subr.mxu0 0.0
        %502 = vmatpush1.xpose.msra.mxu0 0.0
        %503 = vmatprep.subr.mxu0 0.0
        %504 = vmatpush1.xpose.msra.mxu0 0.0
        %505 = vmatprep.subr.mxu0 0.0
        %506 = vmatpush1.xpose.msra.mxu0 0.0
        %507 = vmatprep.subr.mxu0 0.0
        %508 = vmatpush1.xpose.msra.mxu0 0.0
        %509 = vmatprep.subr.mxu0 0.0
        %510 = vmatpush1.xpose.msra.mxu0 0.0
        %511 = vmatprep.subr.mxu0 0.0
        %512 = vmatpush1.xpose.msra.mxu0 %v479
        %513 = vmatprep.subr.mxu0 0.0
        %514 = vmatpush2.xpose.msra.mxu0 0.0
        %515 = vmatprep.subr.mxu0 0.0
        %516 = vmatpush2.xpose.msra.mxu0 0.0
        %517 = vmatprep.subr.mxu0 0.0
        %518 = vmatpush2.xpose.msra.mxu0 0.0
        %519 = vmatprep.subr.mxu0 0.0
        %520 = vmatpush2.xpose.msra.mxu0 0.0
        %521 = vmatprep.subr.mxu0 0.0
        %522 = vmatpush2.xpose.msra.mxu0 0.0
        %523 = vmatprep.subr.mxu0 0.0
        %524 = vmatpush2.xpose.msra.mxu0 0.0
        %525 = vmatprep.subr.mxu0 0.0
        %526 = vmatpush2.xpose.msra.mxu0 0.0
        %527 = vmatprep.subr.mxu0 0.0
        %528 = vmatpush2.xpose.msra.mxu0 0.0
        %529 = vmatprep.subr.mxu0 0.0
        %530 = vmatpush2.xpose.msra.mxu0 0.0
        %531 = vmatprep.subr.mxu0 0.0
        %532 = vmatpush2.xpose.msra.mxu0 0.0
        %533 = vmatprep.subr.mxu0 0.0
        %534 = vmatpush2.xpose.msra.mxu0 0.0
        %535 = vmatprep.subr.mxu0 0.0
        %536 = vmatpush2.xpose.msra.mxu0 0.0
        %537 = vmatprep.subr.mxu0 0.0
        %538 = vmatpush2.xpose.msra.mxu0 0.0
        %539 = vmatprep.subr.mxu0 0.0
        %540 = vmatpush2.xpose.msra.mxu0 0.0
        %541 = vmatprep.subr.mxu0 0.0
        %542 = vmatpush2.xpose.msra.mxu0 0.0
        %543 = vmatprep.subr.mxu0 0.0
        %544 = vmatpush2.xpose.msra.mxu0 0.0
        %545 = vmatprep.mubr.f32.mxu0 0.0
        %546 = vmatmul.mubr.f32.gmra.mxu0 %v477
        %v547 = vpop.f32.mrf.mxu0
        %v548 = vadd.f32 %v472, %v547
        %v549 = vpop.f32.mrf.mxu0
        %550 = vdwg.mxu0
        %vm551 = vcmask 64512
        %v552 = vsel %vm551, %v548, -inf
        %553 = vmax.xlane.f32.xlu0 %v552
        %v554 = vpop.xlane.xlu0 %553
        %v555 = vsub.f32 %v548, %v554
        %v556 = vmul.f32 %v555, 1.442695
        %v557 = vpow.pop %v556
        %v558 = vsel %vm551, %v557, 0.0
        %559 = vadd.xlane.f32.xlu0 %v558
        %v560 = vpop.xlane.xlu0 %559
        %v561 = vrcp.pop %v560
        %v562 = vmul.f32 %v557, %v561
        %563 = vrot.lane.b32.xlu0 %v469, 64
        %v564 = vpop.permute.xlu0 %563
        %v567 = vsel %vm551, %v562, 0
        %569 = vmatprep.subr.mxu0 0.0
        %570 = vmatpush1.msra.mxu0 0.0
        %571 = vmatprep.subr.mxu0 0.0
        %572 = vmatpush1.msra.mxu0 0.0
        %573 = vmatprep.subr.mxu0 0.0
        %574 = vmatpush1.msra.mxu0 0.0
        %575 = vmatprep.subr.mxu0 0.0
        %576 = vmatpush1.msra.mxu0 0.0
        %577 = vmatprep.subr.mxu0 0.0
        %578 = vmatpush1.msra.mxu0 0.0
        %579 = vmatprep.subr.mxu0 0.0
        %580 = vmatpush1.msra.mxu0 0.0
        %581 = vmatprep.subr.mxu0 0.0
        %582 = vmatpush1.msra.mxu0 0.0
        %583 = vmatprep.subr.mxu0 0.0
        %584 = vmatpush1.msra.mxu0 0.0
        %585 = vmatprep.subr.mxu0 0.0
        %586 = vmatpush1.msra.mxu0 0.0
        %587 = vmatprep.subr.mxu0 0.0
        %588 = vmatpush1.msra.mxu0 0.0
        %589 = vmatprep.subr.mxu0 0.0
        %590 = vmatpush1.msra.mxu0 0.0
        %591 = vmatprep.subr.mxu0 0.0
        %592 = vmatpush1.msra.mxu0 0.0
        %593 = vmatprep.subr.mxu0 0.0
        %594 = vmatpush1.msra.mxu0 0.0
        %595 = vmatprep.subr.mxu0 0.0
        %596 = vmatpush1.msra.mxu0 0.0
        %597 = vmatprep.subr.mxu0 0.0
        %598 = vmatpush1.msra.mxu0 0.0
        %599 = vmatprep.subr.mxu0 0.0
        %600 = vmatpush1.msra.mxu0 %v564
        %601 = vmatprep.subr.mxu0 0.0
        %602 = vmatpush2.msra.mxu0 0.0
        %603 = vmatprep.subr.mxu0 0.0
        %604 = vmatpush2.msra.mxu0 0.0
        %605 = vmatprep.subr.mxu0 0.0
        %606 = vmatpush2.msra.mxu0 0.0
        %607 = vmatprep.subr.mxu0 0.0
        %608 = vmatpush2.msra.mxu0 0.0
        %609 = vmatprep.subr.mxu0 0.0
        %610 = vmatpush2.msra.mxu0 0.0
        %611 = vmatprep.subr.mxu0 0.0
        %612 = vmatpush2.msra.mxu0 0.0
        %613 = vmatprep.subr.mxu0 0.0
        %614 = vmatpush2.msra.mxu0 0.0
        %615 = vmatprep.subr.mxu0 0.0
        %616 = vmatpush2.msra.mxu0 0.0
        %617 = vmatprep.subr.mxu0 0.0
        %618 = vmatpush2.msra.mxu0 0.0
        %619 = vmatprep.subr.mxu0 0.0
        %620 = vmatpush2.msra.mxu0 0.0
        %621 = vmatprep.subr.mxu0 0.0
        %622 = vmatpush2.msra.mxu0 0.0
        %623 = vmatprep.subr.mxu0 0.0
        %624 = vmatpush2.msra.mxu0 0.0
        %625 = vmatprep.subr.mxu0 0.0
        %626 = vmatpush2.msra.mxu0 0.0
        %627 = vmatprep.subr.mxu0 0.0
        %628 = vmatpush2.msra.mxu0 0.0
        %629 = vmatprep.subr.mxu0 0.0
        %630 = vmatpush2.msra.mxu0 0.0
        %631 = vmatprep.subr.mxu0 0.0
        %632 = vmatpush2.msra.mxu0 0.0
        %633 = vmatprep.mubr.f32.mxu0 0.0
        %634 = vmatmul.mubr.f32.gmra.mxu0 %v567
        %v635 = vpop.f32.mrf.mxu0
        %v636 = vadd.f32 0.0, %v635
        %v637 = vpop.f32.mrf.mxu0
        %638 = vdwg.mxu0
        %639 = vst.msk [vmem:[#allocation2] sm:$0xff] %vm476, %v636
        %s640 = scalar_lea.vmem %s327, 8 [#allocation9]
        %v641 = vld [vmem:[%s640] sm:$0xff]
        %642 = vrot.lane.b32.xlu0 %v469, 124
        %v643 = vpop.permute.xlu0 %642
        %644 = vrot.lane.b32.xlu0 %v469, 92
        %v645 = vpop.permute.xlu0 %644
        %v646 = vsel %vm476, %v643, 0
        %v648 = vsel %vm476, %v645, 0
        %650 = vmatprep.subr.mxu0 0.0
        %651 = vmatpush1.xpose.msra.mxu0 0.0
        %652 = vmatprep.subr.mxu0 0.0
        %653 = vmatpush1.xpose.msra.mxu0 0.0
        %654 = vmatprep.subr.mxu0 0.0
        %655 = vmatpush1.xpose.msra.mxu0 0.0
        %656 = vmatprep.subr.mxu0 0.0
        %657 = vmatpush1.xpose.msra.mxu0 0.0
        %658 = vmatprep.subr.mxu0 0.0
        %659 = vmatpush1.xpose.msra.mxu0 0.0
        %660 = vmatprep.subr.mxu0 0.0
        %661 = vmatpush1.xpose.msra.mxu0 0.0
        %662 = vmatprep.subr.mxu0 0.0
        %663 = vmatpush1.xpose.msra.mxu0 0.0
        %664 = vmatprep.subr.mxu0 0.0
        %665 = vmatpush1.xpose.msra.mxu0 0.0
        %666 = vmatprep.subr.mxu0 0.0
        %667 = vmatpush1.xpose.msra.mxu0 0.0
        %668 = vmatprep.subr.mxu0 0.0
        %669 = vmatpush1.xpose.msra.mxu0 0.0
        %670 = vmatprep.subr.mxu0 0.0
        %671 = vmatpush1.xpose.msra.mxu0 0.0
        %672 = vmatprep.subr.mxu0 0.0
        %673 = vmatpush1.xpose.msra.mxu0 0.0
        %674 = vmatprep.subr.mxu0 0.0
        %675 = vmatpush1.xpose.msra.mxu0 0.0
        %676 = vmatprep.subr.mxu0 0.0
        %677 = vmatpush1.xpose.msra.mxu0 0.0
        %678 = vmatprep.subr.mxu0 0.0
        %679 = vmatpush1.xpose.msra.mxu0 0.0
        %680 = vmatprep.subr.mxu0 0.0
        %681 = vmatpush1.xpose.msra.mxu0 %v648
        %682 = vmatprep.subr.mxu0 0.0
        %683 = vmatpush2.xpose.msra.mxu0 0.0
        %684 = vmatprep.subr.mxu0 0.0
        %685 = vmatpush2.xpose.msra.mxu0 0.0
        %686 = vmatprep.subr.mxu0 0.0
        %687 = vmatpush2.xpose.msra.mxu0 0.0
        %688 = vmatprep.subr.mxu0 0.0
        %689 = vmatpush2.xpose.msra.mxu0 0.0
        %690 = vmatprep.subr.mxu0 0.0
        %691 = vmatpush2.xpose.msra.mxu0 0.0
        %692 = vmatprep.subr.mxu0 0.0
        %693 = vmatpush2.xpose.msra.mxu0 0.0
        %694 = vmatprep.subr.mxu0 0.0
        %695 = vmatpush2.xpose.msra.mxu0 0.0
        %696 = vmatprep.subr.mxu0 0.0
        %697 = vmatpush2.xpose.msra.mxu0 0.0
        %698 = vmatprep.subr.mxu0 0.0
        %699 = vmatpush2.xpose.msra.mxu0 0.0
        %700 = vmatprep.subr.mxu0 0.0
        %701 = vmatpush2.xpose.msra.mxu0 0.0
        %702 = vmatprep.subr.mxu0 0.0
        %703 = vmatpush2.xpose.msra.mxu0 0.0
        %704 = vmatprep.subr.mxu0 0.0
        %705 = vmatpush2.xpose.msra.mxu0 0.0
        %706 = vmatprep.subr.mxu0 0.0
        %707 = vmatpush2.xpose.msra.mxu0 0.0
        %708 = vmatprep.subr.mxu0 0.0
        %709 = vmatpush2.xpose.msra.mxu0 0.0
        %710 = vmatprep.subr.mxu0 0.0
        %711 = vmatpush2.xpose.msra.mxu0 0.0
        %712 = vmatprep.subr.mxu0 0.0
        %713 = vmatpush2.xpose.msra.mxu0 0.0
        %714 = vmatprep.mubr.f32.mxu0 0.0
        %715 = vmatmul.mubr.f32.gmra.mxu0 %v646
        %v716 = vpop.f32.mrf.mxu0
        %v717 = vadd.f32 %v641, %v716
        %v718 = vpop.f32.mrf.mxu0
        %719 = vdwg.mxu0
        %v720 = vsel %vm551, %v717, -inf
        %721 = vmax.xlane.f32.xlu0 %v720
        %v722 = vpop.xlane.xlu0 %721
        %v723 = vsub.f32 %v717, %v722
        %v724 = vmul.f32 %v723, 1.442695
        %v725 = vpow.pop %v724
        %v726 = vsel %vm551, %v725, 0.0
        %727 = vadd.xlane.f32.xlu0 %v726
        %v728 = vpop.xlane.xlu0 %727
        %v729 = vrcp.pop %v728
        %v730 = vmul.f32 %v725, %v729
        %731 = vrot.lane.b32.xlu0 %v469, 60
        %v732 = vpop.permute.xlu0 %731
        %v735 = vsel %vm551, %v730, 0
        %737 = vmatprep.subr.mxu0 0.0
        %738 = vmatpush1.msra.mxu0 0.0
        %739 = vmatprep.subr.mxu0 0.0
        %740 = vmatpush1.msra.mxu0 0.0
        %741 = vmatprep.subr.mxu0 0.0
        %742 = vmatpush1.msra.mxu0 0.0
        %743 = vmatprep.subr.mxu0 0.0
        %744 = vmatpush1.msra.mxu0 0.0
        %745 = vmatprep.subr.mxu0 0.0
        %746 = vmatpush1.msra.mxu0 0.0
        %747 = vmatprep.subr.mxu0 0.0
        %748 = vmatpush1.msra.mxu0 0.0
        %749 = vmatprep.subr.mxu0 0.0
        %750 = vmatpush1.msra.mxu0 0.0
        %751 = vmatprep.subr.mxu0 0.0
        %752 = vmatpush1.msra.mxu0 0.0
        %753 = vmatprep.subr.mxu0 0.0
        %754 = vmatpush1.msra.mxu0 0.0
        %755 = vmatprep.subr.mxu0 0.0
        %756 = vmatpush1.msra.mxu0 0.0
        %757 = vmatprep.subr.mxu0 0.0
        %758 = vmatpush1.msra.mxu0 0.0
        %759 = vmatprep.subr.mxu0 0.0
        %760 = vmatpush1.msra.mxu0 0.0
        %761 = vmatprep.subr.mxu0 0.0
        %762 = vmatpush1.msra.mxu0 0.0
        %763 = vmatprep.subr.mxu0 0.0
        %764 = vmatpush1.msra.mxu0 0.0
        %765 = vmatprep.subr.mxu0 0.0
        %766 = vmatpush1.msra.mxu0 0.0
        %767 = vmatprep.subr.mxu0 0.0
        %768 = vmatpush1.msra.mxu0 %v732
        %769 = vmatprep.subr.mxu0 0.0
        %770 = vmatpush2.msra.mxu0 0.0
        %771 = vmatprep.subr.mxu0 0.0
        %772 = vmatpush2.msra.mxu0 0.0
        %773 = vmatprep.subr.mxu0 0.0
        %774 = vmatpush2.msra.mxu0 0.0
        %775 = vmatprep.subr.mxu0 0.0
        %776 = vmatpush2.msra.mxu0 0.0
        %777 = vmatprep.subr.mxu0 0.0
        %778 = vmatpush2.msra.mxu0 0.0
        %779 = vmatprep.subr.mxu0 0.0
        %780 = vmatpush2.msra.mxu0 0.0
        %781 = vmatprep.subr.mxu0 0.0
        %782 = vmatpush2.msra.mxu0 0.0
        %783 = vmatprep.subr.mxu0 0.0
        %784 = vmatpush2.msra.mxu0 0.0
        %785 = vmatprep.subr.mxu0 0.0
        %786 = vmatpush2.msra.mxu0 0.0
        %787 = vmatprep.subr.mxu0 0.0
        %788 = vmatpush2.msra.mxu0 0.0
        %789 = vmatprep.subr.mxu0 0.0
        %790 = vmatpush2.msra.mxu0 0.0
        %791 = vmatprep.subr.mxu0 0.0
        %792 = vmatpush2.msra.mxu0 0.0
        %793 = vmatprep.subr.mxu0 0.0
        %794 = vmatpush2.msra.mxu0 0.0
        %795 = vmatprep.subr.mxu0 0.0
        %796 = vmatpush2.msra.mxu0 0.0
        %797 = vmatprep.subr.mxu0 0.0
        %798 = vmatpush2.msra.mxu0 0.0
        %799 = vmatprep.subr.mxu0 0.0
        %800 = vmatpush2.msra.mxu0 0.0
        %801 = vmatprep.mubr.f32.mxu0 0.0
        %802 = vmatmul.mubr.f32.gmra.mxu0 %v735
        %v803 = vpop.f32.mrf.mxu0
        %v804 = vadd.f32 0.0, %v803
        %v805 = vpop.f32.mrf.mxu0
        %806 = vdwg.mxu0
        %808 = vrot.lane.b32.xlu0 %v804, 4
        %v809 = vpop.permute.xlu0 %808
        %vm811 = vcmask 64544
        %812 = vst.msk [vmem:[#allocation2] sm:$0xff] %vm811, %v809
        %s813 = scalar_lea.vmem %s327, 16 [#allocation9]
        %v814 = vld [vmem:[%s813] sm:$0xff]
        %815 = vrot.lane.b32.xlu0 %v469, 120
        %v816 = vpop.permute.xlu0 %815
        %817 = vrot.lane.b32.xlu0 %v469, 88
        %v818 = vpop.permute.xlu0 %817
        %v819 = vsel %vm476, %v816, 0
        %v821 = vsel %vm476, %v818, 0
        %823 = vmatprep.subr.mxu0 0.0
        %824 = vmatpush1.xpose.msra.mxu0 0.0
        %825 = vmatprep.subr.mxu0 0.0
        %826 = vmatpush1.xpose.msra.mxu0 0.0
        %827 = vmatprep.subr.mxu0 0.0
        %828 = vmatpush1.xpose.msra.mxu0 0.0
        %829 = vmatprep.subr.mxu0 0.0
        %830 = vmatpush1.xpose.msra.mxu0 0.0
        %831 = vmatprep.subr.mxu0 0.0
        %832 = vmatpush1.xpose.msra.mxu0 0.0
        %833 = vmatprep.subr.mxu0 0.0
        %834 = vmatpush1.xpose.msra.mxu0 0.0
        %835 = vmatprep.subr.mxu0 0.0
        %836 = vmatpush1.xpose.msra.mxu0 0.0
        %837 = vmatprep.subr.mxu0 0.0
        %838 = vmatpush1.xpose.msra.mxu0 0.0
        %839 = vmatprep.subr.mxu0 0.0
        %840 = vmatpush1.xpose.msra.mxu0 0.0
        %841 = vmatprep.subr.mxu0 0.0
        %842 = vmatpush1.xpose.msra.mxu0 0.0
        %843 = vmatprep.subr.mxu0 0.0
        %844 = vmatpush1.xpose.msra.mxu0 0.0
        %845 = vmatprep.subr.mxu0 0.0
        %846 = vmatpush1.xpose.msra.mxu0 0.0
        %847 = vmatprep.subr.mxu0 0.0
        %848 = vmatpush1.xpose.msra.mxu0 0.0
        %849 = vmatprep.subr.mxu0 0.0
        %850 = vmatpush1.xpose.msra.mxu0 0.0
        %851 = vmatprep.subr.mxu0 0.0
        %852 = vmatpush1.xpose.msra.mxu0 0.0
        %853 = vmatprep.subr.mxu0 0.0
        %854 = vmatpush1.xpose.msra.mxu0 %v821
        %855 = vmatprep.subr.mxu0 0.0
        %856 = vmatpush2.xpose.msra.mxu0 0.0
        %857 = vmatprep.subr.mxu0 0.0
        %858 = vmatpush2.xpose.msra.mxu0 0.0
        %859 = vmatprep.subr.mxu0 0.0
        %860 = vmatpush2.xpose.msra.mxu0 0.0
        %861 = vmatprep.subr.mxu0 0.0
        %862 = vmatpush2.xpose.msra.mxu0 0.0
        %863 = vmatprep.subr.mxu0 0.0
        %864 = vmatpush2.xpose.msra.mxu0 0.0
        %865 = vmatprep.subr.mxu0 0.0
        %866 = vmatpush2.xpose.msra.mxu0 0.0
        %867 = vmatprep.subr.mxu0 0.0
        %868 = vmatpush2.xpose.msra.mxu0 0.0
        %869 = vmatprep.subr.mxu0 0.0
        %870 = vmatpush2.xpose.msra.mxu0 0.0
        %871 = vmatprep.subr.mxu0 0.0
        %872 = vmatpush2.xpose.msra.mxu0 0.0
        %873 = vmatprep.subr.mxu0 0.0
        %874 = vmatpush2.xpose.msra.mxu0 0.0
        %875 = vmatprep.subr.mxu0 0.0
        %876 = vmatpush2.xpose.msra.mxu0 0.0
        %877 = vmatprep.subr.mxu0 0.0
        %878 = vmatpush2.xpose.msra.mxu0 0.0
        %879 = vmatprep.subr.mxu0 0.0
        %880 = vmatpush2.xpose.msra.mxu0 0.0
        %881 = vmatprep.subr.mxu0 0.0
        %882 = vmatpush2.xpose.msra.mxu0 0.0
        %883 = vmatprep.subr.mxu0 0.0
        %884 = vmatpush2.xpose.msra.mxu0 0.0
        %885 = vmatprep.subr.mxu0 0.0
        %886 = vmatpush2.xpose.msra.mxu0 0.0
        %887 = vmatprep.mubr.f32.mxu0 0.0
        %888 = vmatmul.mubr.f32.gmra.mxu0 %v819
        %v889 = vpop.f32.mrf.mxu0
        %v890 = vadd.f32 %v814, %v889
        %v891 = vpop.f32.mrf.mxu0
        %892 = vdwg.mxu0
        %v893 = vsel %vm551, %v890, -inf
        %894 = vmax.xlane.f32.xlu0 %v893
        %v895 = vpop.xlane.xlu0 %894
        %v896 = vsub.f32 %v890, %v895
        %v897 = vmul.f32 %v896, 1.442695
        %v898 = vpow.pop %v897
        %v899 = vsel %vm551, %v898, 0.0
        %900 = vadd.xlane.f32.xlu0 %v899
        %v901 = vpop.xlane.xlu0 %900
        %v902 = vrcp.pop %v901
        %v903 = vmul.f32 %v898, %v902
        %904 = vrot.lane.b32.xlu0 %v469, 56
        %v905 = vpop.permute.xlu0 %904
        %v908 = vsel %vm551, %v903, 0
        %910 = vmatprep.subr.mxu0 0.0
        %911 = vmatpush1.msra.mxu0 0.0
        %912 = vmatprep.subr.mxu0 0.0
        %913 = vmatpush1.msra.mxu0 0.0
        %914 = vmatprep.subr.mxu0 0.0
        %915 = vmatpush1.msra.mxu0 0.0
        %916 = vmatprep.subr.mxu0 0.0
        %917 = vmatpush1.msra.mxu0 0.0
        %918 = vmatprep.subr.mxu0 0.0
        %919 = vmatpush1.msra.mxu0 0.0
        %920 = vmatprep.subr.mxu0 0.0
        %921 = vmatpush1.msra.mxu0 0.0
        %922 = vmatprep.subr.mxu0 0.0
        %923 = vmatpush1.msra.mxu0 0.0
        %924 = vmatprep.subr.mxu0 0.0
        %925 = vmatpush1.msra.mxu0 0.0
        %926 = vmatprep.subr.mxu0 0.0
        %927 = vmatpush1.msra.mxu0 0.0
        %928 = vmatprep.subr.mxu0 0.0
        %929 = vmatpush1.msra.mxu0 0.0
        %930 = vmatprep.subr.mxu0 0.0
        %931 = vmatpush1.msra.mxu0 0.0
        %932 = vmatprep.subr.mxu0 0.0
        %933 = vmatpush1.msra.mxu0 0.0
        %934 = vmatprep.subr.mxu0 0.0
        %935 = vmatpush1.msra.mxu0 0.0
        %936 = vmatprep.subr.mxu0 0.0
        %937 = vmatpush1.msra.mxu0 0.0
        %938 = vmatprep.subr.mxu0 0.0
        %939 = vmatpush1.msra.mxu0 0.0
        %940 = vmatprep.subr.mxu0 0.0
        %941 = vmatpush1.msra.mxu0 %v905
        %942 = vmatprep.subr.mxu0 0.0
        %943 = vmatpush2.msra.mxu0 0.0
        %944 = vmatprep.subr.mxu0 0.0
        %945 = vmatpush2.msra.mxu0 0.0
        %946 = vmatprep.subr.mxu0 0.0
        %947 = vmatpush2.msra.mxu0 0.0
        %948 = vmatprep.subr.mxu0 0.0
        %949 = vmatpush2.msra.mxu0 0.0
        %950 = vmatprep.subr.mxu0 0.0
        %951 = vmatpush2.msra.mxu0 0.0
        %952 = vmatprep.subr.mxu0 0.0
        %953 = vmatpush2.msra.mxu0 0.0
        %954 = vmatprep.subr.mxu0 0.0
        %955 = vmatpush2.msra.mxu0 0.0
        %956 = vmatprep.subr.mxu0 0.0
        %957 = vmatpush2.msra.mxu0 0.0
        %958 = vmatprep.subr.mxu0 0.0
        %959 = vmatpush2.msra.mxu0 0.0
        %960 = vmatprep.subr.mxu0 0.0
        %961 = vmatpush2.msra.mxu0 0.0
        %962 = vmatprep.subr.mxu0 0.0
        %963 = vmatpush2.msra.mxu0 0.0
        %964 = vmatprep.subr.mxu0 0.0
        %965 = vmatpush2.msra.mxu0 0.0
        %966 = vmatprep.subr.mxu0 0.0
        %967 = vmatpush2.msra.mxu0 0.0
        %968 = vmatprep.subr.mxu0 0.0
        %969 = vmatpush2.msra.mxu0 0.0
        %970 = vmatprep.subr.mxu0 0.0
        %971 = vmatpush2.msra.mxu0 0.0
        %972 = vmatprep.subr.mxu0 0.0
        %973 = vmatpush2.msra.mxu0 0.0
        %974 = vmatprep.mubr.f32.mxu0 0.0
        %975 = vmatmul.mubr.f32.gmra.mxu0 %v908
        %v976 = vpop.f32.mrf.mxu0
        %v977 = vadd.f32 0.0, %v976
        %v978 = vpop.f32.mrf.mxu0
        %979 = vdwg.mxu0
        %981 = vrot.lane.b32.xlu0 %v977, 8
        %v982 = vpop.permute.xlu0 %981
        %vm984 = vcmask 97344
        %985 = vst.msk [vmem:[#allocation2] sm:$0xff] %vm984, %v982
        %s986 = scalar_lea.vmem %s327, 24 [#allocation9]
        %v987 = vld [vmem:[%s986] sm:$0xff]
        %988 = vrot.lane.b32.xlu0 %v469, 116
        %v989 = vpop.permute.xlu0 %988
        %990 = vrot.lane.b32.xlu0 %v469, 84
        %v991 = vpop.permute.xlu0 %990
        %v992 = vsel %vm476, %v989, 0
        %v994 = vsel %vm476, %v991, 0
        %996 = vmatprep.subr.mxu0 0.0
        %997 = vmatpush1.xpose.msra.mxu0 0.0
        %998 = vmatprep.subr.mxu0 0.0
        %999 = vmatpush1.xpose.msra.mxu0 0.0
        %1000 = vmatprep.subr.mxu0 0.0
        %1001 = vmatpush1.xpose.msra.mxu0 0.0
        %1002 = vmatprep.subr.mxu0 0.0
        %1003 = vmatpush1.xpose.msra.mxu0 0.0
        %1004 = vmatprep.subr.mxu0 0.0
        %1005 = vmatpush1.xpose.msra.mxu0 0.0
        %1006 = vmatprep.subr.mxu0 0.0
        %1007 = vmatpush1.xpose.msra.mxu0 0.0
        %1008 = vmatprep.subr.mxu0 0.0
        %1009 = vmatpush1.xpose.msra.mxu0 0.0
        %1010 = vmatprep.subr.mxu0 0.0
        %1011 = vmatpush1.xpose.msra.mxu0 0.0
        %1012 = vmatprep.subr.mxu0 0.0
        %1013 = vmatpush1.xpose.msra.mxu0 0.0
        %1014 = vmatprep.subr.mxu0 0.0
        %1015 = vmatpush1.xpose.msra.mxu0 0.0
        %1016 = vmatprep.subr.mxu0 0.0
        %1017 = vmatpush1.xpose.msra.mxu0 0.0
        %1018 = vmatprep.subr.mxu0 0.0
        %1019 = vmatpush1.xpose.msra.mxu0 0.0
        %1020 = vmatprep.subr.mxu0 0.0
        %1021 = vmatpush1.xpose.msra.mxu0 0.0
        %1022 = vmatprep.subr.mxu0 0.0
        %1023 = vmatpush1.xpose.msra.mxu0 0.0
        %1024 = vmatprep.subr.mxu0 0.0
        %1025 = vmatpush1.xpose.msra.mxu0 0.0
        %1026 = vmatprep.subr.mxu0 0.0
        %1027 = vmatpush1.xpose.msra.mxu0 %v994
        %1028 = vmatprep.subr.mxu0 0.0
        %1029 = vmatpush2.xpose.msra.mxu0 0.0
        %1030 = vmatprep.subr.mxu0 0.0
        %1031 = vmatpush2.xpose.msra.mxu0 0.0
        %1032 = vmatprep.subr.mxu0 0.0
        %1033 = vmatpush2.xpose.msra.mxu0 0.0
        %1034 = vmatprep.subr.mxu0 0.0
        %1035 = vmatpush2.xpose.msra.mxu0 0.0
        %1036 = vmatprep.subr.mxu0 0.0
        %1037 = vmatpush2.xpose.msra.mxu0 0.0
        %1038 = vmatprep.subr.mxu0 0.0
        %1039 = vmatpush2.xpose.msra.mxu0 0.0
        %1040 = vmatprep.subr.mxu0 0.0
        %1041 = vmatpush2.xpose.msra.mxu0 0.0
        %1042 = vmatprep.subr.mxu0 0.0
        %1043 = vmatpush2.xpose.msra.mxu0 0.0
        %1044 = vmatprep.subr.mxu0 0.0
        %1045 = vmatpush2.xpose.msra.mxu0 0.0
        %1046 = vmatprep.subr.mxu0 0.0
        %1047 = vmatpush2.xpose.msra.mxu0 0.0
        %1048 = vmatprep.subr.mxu0 0.0
        %1049 = vmatpush2.xpose.msra.mxu0 0.0
        %1050 = vmatprep.subr.mxu0 0.0
        %1051 = vmatpush2.xpose.msra.mxu0 0.0
        %1052 = vmatprep.subr.mxu0 0.0
        %1053 = vmatpush2.xpose.msra.mxu0 0.0
        %1054 = vmatprep.subr.mxu0 0.0
        %1055 = vmatpush2.xpose.msra.mxu0 0.0
        %1056 = vmatprep.subr.mxu0 0.0
        %1057 = vmatpush2.xpose.msra.mxu0 0.0
        %1058 = vmatprep.subr.mxu0 0.0
        %1059 = vmatpush2.xpose.msra.mxu0 0.0
        %1060 = vmatprep.mubr.f32.mxu0 0.0
        %1061 = vmatmul.mubr.f32.gmra.mxu0 %v992
        %v1062 = vpop.f32.mrf.mxu0
        %v1063 = vadd.f32 %v987, %v1062
        %v1064 = vpop.f32.mrf.mxu0
        %1065 = vdwg.mxu0
        %v1066 = vsel %vm551, %v1063, -inf
        %1067 = vmax.xlane.f32.xlu0 %v1066
        %v1068 = vpop.xlane.xlu0 %1067
        %v1069 = vsub.f32 %v1063, %v1068
        %v1070 = vmul.f32 %v1069, 1.442695
        %v1071 = vpow.pop %v1070
        %v1072 = vsel %vm551, %v1071, 0.0
        %1073 = vadd.xlane.f32.xlu0 %v1072
        %v1074 = vpop.xlane.xlu0 %1073
        %v1075 = vrcp.pop %v1074
        %v1076 = vmul.f32 %v1071, %v1075
        %1077 = vrot.lane.b32.xlu0 %v469, 52
        %v1078 = vpop.permute.xlu0 %1077
        %v1081 = vsel %vm551, %v1076, 0
        %1083 = vmatprep.subr.mxu0 0.0
        %1084 = vmatpush1.msra.mxu0 0.0
        %1085 = vmatprep.subr.mxu0 0.0
        %1086 = vmatpush1.msra.mxu0 0.0
        %1087 = vmatprep.subr.mxu0 0.0
        %1088 = vmatpush1.msra.mxu0 0.0
        %1089 = vmatprep.subr.mxu0 0.0
        %1090 = vmatpush1.msra.mxu0 0.0
        %1091 = vmatprep.subr.mxu0 0.0
        %1092 = vmatpush1.msra.mxu0 0.0
        %1093 = vmatprep.subr.mxu0 0.0
        %1094 = vmatpush1.msra.mxu0 0.0
        %1095 = vmatprep.subr.mxu0 0.0
        %1096 = vmatpush1.msra.mxu0 0.0
        %1097 = vmatprep.subr.mxu0 0.0
        %1098 = vmatpush1.msra.mxu0 0.0
        %1099 = vmatprep.subr.mxu0 0.0
        %1100 = vmatpush1.msra.mxu0 0.0
        %1101 = vmatprep.subr.mxu0 0.0
        %1102 = vmatpush1.msra.mxu0 0.0
        %1103 = vmatprep.subr.mxu0 0.0
        %1104 = vmatpush1.msra.mxu0 0.0
        %1105 = vmatprep.subr.mxu0 0.0
        %1106 = vmatpush1.msra.mxu0 0.0
        %1107 = vmatprep.subr.mxu0 0.0
        %1108 = vmatpush1.msra.mxu0 0.0
        %1109 = vmatprep.subr.mxu0 0.0
        %1110 = vmatpush1.msra.mxu0 0.0
        %1111 = vmatprep.subr.mxu0 0.0
        %1112 = vmatpush1.msra.mxu0 0.0
        %1113 = vmatprep.subr.mxu0 0.0
        %1114 = vmatpush1.msra.mxu0 %v1078
        %1115 = vmatprep.subr.mxu0 0.0
        %1116 = vmatpush2.msra.mxu0 0.0
        %1117 = vmatprep.subr.mxu0 0.0
        %1118 = vmatpush2.msra.mxu0 0.0
        %1119 = vmatprep.subr.mxu0 0.0
        %1120 = vmatpush2.msra.mxu0 0.0
        %1121 = vmatprep.subr.mxu0 0.0
        %1122 = vmatpush2.msra.mxu0 0.0
        %1123 = vmatprep.subr.mxu0 0.0
        %1124 = vmatpush2.msra.mxu0 0.0
        %1125 = vmatprep.subr.mxu0 0.0
        %1126 = vmatpush2.msra.mxu0 0.0
        %1127 = vmatprep.subr.mxu0 0.0
        %1128 = vmatpush2.msra.mxu0 0.0
        %1129 = vmatprep.subr.mxu0 0.0
        %1130 = vmatpush2.msra.mxu0 0.0
        %1131 = vmatprep.subr.mxu0 0.0
        %1132 = vmatpush2.msra.mxu0 0.0
        %1133 = vmatprep.subr.mxu0 0.0
        %1134 = vmatpush2.msra.mxu0 0.0
        %1135 = vmatprep.subr.mxu0 0.0
        %1136 = vmatpush2.msra.mxu0 0.0
        %1137 = vmatprep.subr.mxu0 0.0
        %1138 = vmatpush2.msra.mxu0 0.0
        %1139 = vmatprep.subr.mxu0 0.0
        %1140 = vmatpush2.msra.mxu0 0.0
        %1141 = vmatprep.subr.mxu0 0.0
        %1142 = vmatpush2.msra.mxu0 0.0
        %1143 = vmatprep.subr.mxu0 0.0
        %1144 = vmatpush2.msra.mxu0 0.0
        %1145 = vmatprep.subr.mxu0 0.0
        %1146 = vmatpush2.msra.mxu0 0.0
        %1147 = vmatprep.mubr.f32.mxu0 0.0
        %1148 = vmatmul.mubr.f32.gmra.mxu0 %v1081
        %v1149 = vpop.f32.mrf.mxu0
        %v1150 = vadd.f32 0.0, %v1149
        %v1151 = vpop.f32.mrf.mxu0
        %1152 = vdwg.mxu0
        %1154 = vrot.lane.b32.xlu0 %v1150, 12
        %v1155 = vpop.permute.xlu0 %1154
        %vm1157 = vcmask 130144
        %1158 = vst.msk [vmem:[#allocation2] sm:$0xff] %vm1157, %v1155
        %s1159 = scalar_lea.vmem %s327, 32 [#allocation9]
        %v1160 = vld [vmem:[%s1159] sm:$0xff]
        %1161 = vrot.lane.b32.xlu0 %v469, 112
        %v1162 = vpop.permute.xlu0 %1161
        %1163 = vrot.lane.b32.xlu0 %v469, 80
        %v1164 = vpop.permute.xlu0 %1163
        %v1165 = vsel %vm476, %v1162, 0
        %v1167 = vsel %vm476, %v1164, 0
        %1169 = vmatprep.subr.mxu0 0.0
        %1170 = vmatpush1.xpose.msra.mxu0 0.0
        %1171 = vmatprep.subr.mxu0 0.0
        %1172 = vmatpush1.xpose.msra.mxu0 0.0
        %1173 = vmatprep.subr.mxu0 0.0
        %1174 = vmatpush1.xpose.msra.mxu0 0.0
        %1175 = vmatprep.subr.mxu0 0.0
        %1176 = vmatpush1.xpose.msra.mxu0 0.0
        %1177 = vmatprep.subr.mxu0 0.0
        %1178 = vmatpush1.xpose.msra.mxu0 0.0
        %1179 = vmatprep.subr.mxu0 0.0
        %1180 = vmatpush1.xpose.msra.mxu0 0.0
        %1181 = vmatprep.subr.mxu0 0.0
        %1182 = vmatpush1.xpose.msra.mxu0 0.0
        %1183 = vmatprep.subr.mxu0 0.0
        %1184 = vmatpush1.xpose.msra.mxu0 0.0
        %1185 = vmatprep.subr.mxu0 0.0
        %1186 = vmatpush1.xpose.msra.mxu0 0.0
        %1187 = vmatprep.subr.mxu0 0.0
        %1188 = vmatpush1.xpose.msra.mxu0 0.0
        %1189 = vmatprep.subr.mxu0 0.0
        %1190 = vmatpush1.xpose.msra.mxu0 0.0
        %1191 = vmatprep.subr.mxu0 0.0
        %1192 = vmatpush1.xpose.msra.mxu0 0.0
        %1193 = vmatprep.subr.mxu0 0.0
        %1194 = vmatpush1.xpose.msra.mxu0 0.0
        %1195 = vmatprep.subr.mxu0 0.0
        %1196 = vmatpush1.xpose.msra.mxu0 0.0
        %1197 = vmatprep.subr.mxu0 0.0
        %1198 = vmatpush1.xpose.msra.mxu0 0.0
        %1199 = vmatprep.subr.mxu0 0.0
        %1200 = vmatpush1.xpose.msra.mxu0 %v1167
        %1201 = vmatprep.subr.mxu0 0.0
        %1202 = vmatpush2.xpose.msra.mxu0 0.0
        %1203 = vmatprep.subr.mxu0 0.0
        %1204 = vmatpush2.xpose.msra.mxu0 0.0
        %1205 = vmatprep.subr.mxu0 0.0
        %1206 = vmatpush2.xpose.msra.mxu0 0.0
        %1207 = vmatprep.subr.mxu0 0.0
        %1208 = vmatpush2.xpose.msra.mxu0 0.0
        %1209 = vmatprep.subr.mxu0 0.0
        %1210 = vmatpush2.xpose.msra.mxu0 0.0
        %1211 = vmatprep.subr.mxu0 0.0
        %1212 = vmatpush2.xpose.msra.mxu0 0.0
        %1213 = vmatprep.subr.mxu0 0.0
        %1214 = vmatpush2.xpose.msra.mxu0 0.0
        %1215 = vmatprep.subr.mxu0 0.0
        %1216 = vmatpush2.xpose.msra.mxu0 0.0
        %1217 = vmatprep.subr.mxu0 0.0
        %1218 = vmatpush2.xpose.msra.mxu0 0.0
        %1219 = vmatprep.subr.mxu0 0.0
        %1220 = vmatpush2.xpose.msra.mxu0 0.0
        %1221 = vmatprep.subr.mxu0 0.0
        %1222 = vmatpush2.xpose.msra.mxu0 0.0
        %1223 = vmatprep.subr.mxu0 0.0
        %1224 = vmatpush2.xpose.msra.mxu0 0.0
        %1225 = vmatprep.subr.mxu0 0.0
        %1226 = vmatpush2.xpose.msra.mxu0 0.0
        %1227 = vmatprep.subr.mxu0 0.0
        %1228 = vmatpush2.xpose.msra.mxu0 0.0
        %1229 = vmatprep.subr.mxu0 0.0
        %1230 = vmatpush2.xpose.msra.mxu0 0.0
        %1231 = vmatprep.subr.mxu0 0.0
        %1232 = vmatpush2.xpose.msra.mxu0 0.0
        %1233 = vmatprep.mubr.f32.mxu0 0.0
        %1234 = vmatmul.mubr.f32.gmra.mxu0 %v1165
        %v1235 = vpop.f32.mrf.mxu0
        %v1236 = vadd.f32 %v1160, %v1235
        %v1237 = vpop.f32.mrf.mxu0
        %1238 = vdwg.mxu0
        %v1239 = vsel %vm551, %v1236, -inf
        %1240 = vmax.xlane.f32.xlu0 %v1239
        %v1241 = vpop.xlane.xlu0 %1240
        %v1242 = vsub.f32 %v1236, %v1241
        %v1243 = vmul.f32 %v1242, 1.442695
        %v1244 = vpow.pop %v1243
        %v1245 = vsel %vm551, %v1244, 0.0
        %1246 = vadd.xlane.f32.xlu0 %v1245
        %v1247 = vpop.xlane.xlu0 %1246
        %v1248 = vrcp.pop %v1247
        %v1249 = vmul.f32 %v1244, %v1248
        %1250 = vrot.lane.b32.xlu0 %v469, 48
        %v1251 = vpop.permute.xlu0 %1250
        %v1254 = vsel %vm551, %v1249, 0
        %1256 = vmatprep.subr.mxu0 0.0
        %1257 = vmatpush1.msra.mxu0 0.0
        %1258 = vmatprep.subr.mxu0 0.0
        %1259 = vmatpush1.msra.mxu0 0.0
        %1260 = vmatprep.subr.mxu0 0.0
        %1261 = vmatpush1.msra.mxu0 0.0
        %1262 = vmatprep.subr.mxu0 0.0
        %1263 = vmatpush1.msra.mxu0 0.0
        %1264 = vmatprep.subr.mxu0 0.0
        %1265 = vmatpush1.msra.mxu0 0.0
        %1266 = vmatprep.subr.mxu0 0.0
        %1267 = vmatpush1.msra.mxu0 0.0
        %1268 = vmatprep.subr.mxu0 0.0
        %1269 = vmatpush1.msra.mxu0 0.0
        %1270 = vmatprep.subr.mxu0 0.0
        %1271 = vmatpush1.msra.mxu0 0.0
        %1272 = vmatprep.subr.mxu0 0.0
        %1273 = vmatpush1.msra.mxu0 0.0
        %1274 = vmatprep.subr.mxu0 0.0
        %1275 = vmatpush1.msra.mxu0 0.0
        %1276 = vmatprep.subr.mxu0 0.0
        %1277 = vmatpush1.msra.mxu0 0.0
        %1278 = vmatprep.subr.mxu0 0.0
        %1279 = vmatpush1.msra.mxu0 0.0
        %1280 = vmatprep.subr.mxu0 0.0
        %1281 = vmatpush1.msra.mxu0 0.0
        %1282 = vmatprep.subr.mxu0 0.0
        %1283 = vmatpush1.msra.mxu0 0.0
        %1284 = vmatprep.subr.mxu0 0.0
        %1285 = vmatpush1.msra.mxu0 0.0
        %1286 = vmatprep.subr.mxu0 0.0
        %1287 = vmatpush1.msra.mxu0 %v1251
        %1288 = vmatprep.subr.mxu0 0.0
        %1289 = vmatpush2.msra.mxu0 0.0
        %1290 = vmatprep.subr.mxu0 0.0
        %1291 = vmatpush2.msra.mxu0 0.0
        %1292 = vmatprep.subr.mxu0 0.0
        %1293 = vmatpush2.msra.mxu0 0.0
        %1294 = vmatprep.subr.mxu0 0.0
        %1295 = vmatpush2.msra.mxu0 0.0
        %1296 = vmatprep.subr.mxu0 0.0
        %1297 = vmatpush2.msra.mxu0 0.0
        %1298 = vmatprep.subr.mxu0 0.0
        %1299 = vmatpush2.msra.mxu0 0.0
        %1300 = vmatprep.subr.mxu0 0.0
        %1301 = vmatpush2.msra.mxu0 0.0
        %1302 = vmatprep.subr.mxu0 0.0
        %1303 = vmatpush2.msra.mxu0 0.0
        %1304 = vmatprep.subr.mxu0 0.0
        %1305 = vmatpush2.msra.mxu0 0.0
        %1306 = vmatprep.subr.mxu0 0.0
        %1307 = vmatpush2.msra.mxu0 0.0
        %1308 = vmatprep.subr.mxu0 0.0
        %1309 = vmatpush2.msra.mxu0 0.0
        %1310 = vmatprep.subr.mxu0 0.0
        %1311 = vmatpush2.msra.mxu0 0.0
        %1312 = vmatprep.subr.mxu0 0.0
        %1313 = vmatpush2.msra.mxu0 0.0
        %1314 = vmatprep.subr.mxu0 0.0
        %1315 = vmatpush2.msra.mxu0 0.0
        %1316 = vmatprep.subr.mxu0 0.0
        %1317 = vmatpush2.msra.mxu0 0.0
        %1318 = vmatprep.subr.mxu0 0.0
        %1319 = vmatpush2.msra.mxu0 0.0
        %1320 = vmatprep.mubr.f32.mxu0 0.0
        %1321 = vmatmul.mubr.f32.gmra.mxu0 %v1254
        %v1322 = vpop.f32.mrf.mxu0
        %v1323 = vadd.f32 0.0, %v1322
        %v1324 = vpop.f32.mrf.mxu0
        %1325 = vdwg.mxu0
        %1327 = vrot.lane.b32.xlu0 %v1323, 16
        %v1328 = vpop.permute.xlu0 %1327
        %vm1330 = vcmask 162944
        %1331 = vst.msk [vmem:[#allocation2] sm:$0xff] %vm1330, %v1328
        %s1332 = scalar_lea.vmem %s327, 40 [#allocation9]
        %v1333 = vld [vmem:[%s1332] sm:$0xff]
        %1334 = vrot.lane.b32.xlu0 %v469, 108
        %v1335 = vpop.permute.xlu0 %1334
        %1336 = vrot.lane.b32.xlu0 %v469, 76
        %v1337 = vpop.permute.xlu0 %1336
        %v1338 = vsel %vm476, %v1335, 0
        %v1340 = vsel %vm476, %v1337, 0
        %1342 = vmatprep.subr.mxu0 0.0
        %1343 = vmatpush1.xpose.msra.mxu0 0.0
        %1344 = vmatprep.subr.mxu0 0.0
        %1345 = vmatpush1.xpose.msra.mxu0 0.0
        %1346 = vmatprep.subr.mxu0 0.0
        %1347 = vmatpush1.xpose.msra.mxu0 0.0
        %1348 = vmatprep.subr.mxu0 0.0
        %1349 = vmatpush1.xpose.msra.mxu0 0.0
        %1350 = vmatprep.subr.mxu0 0.0
        %1351 = vmatpush1.xpose.msra.mxu0 0.0
        %1352 = vmatprep.subr.mxu0 0.0
        %1353 = vmatpush1.xpose.msra.mxu0 0.0
        %1354 = vmatprep.subr.mxu0 0.0
        %1355 = vmatpush1.xpose.msra.mxu0 0.0
        %1356 = vmatprep.subr.mxu0 0.0
        %1357 = vmatpush1.xpose.msra.mxu0 0.0
        %1358 = vmatprep.subr.mxu0 0.0
        %1359 = vmatpush1.xpose.msra.mxu0 0.0
        %1360 = vmatprep.subr.mxu0 0.0
        %1361 = vmatpush1.xpose.msra.mxu0 0.0
        %1362 = vmatprep.subr.mxu0 0.0
        %1363 = vmatpush1.xpose.msra.mxu0 0.0
        %1364 = vmatprep.subr.mxu0 0.0
        %1365 = vmatpush1.xpose.msra.mxu0 0.0
        %1366 = vmatprep.subr.mxu0 0.0
        %1367 = vmatpush1.xpose.msra.mxu0 0.0
        %1368 = vmatprep.subr.mxu0 0.0
        %1369 = vmatpush1.xpose.msra.mxu0 0.0
        %1370 = vmatprep.subr.mxu0 0.0
        %1371 = vmatpush1.xpose.msra.mxu0 0.0
        %1372 = vmatprep.subr.mxu0 0.0
        %1373 = vmatpush1.xpose.msra.mxu0 %v1340
        %1374 = vmatprep.subr.mxu0 0.0
        %1375 = vmatpush2.xpose.msra.mxu0 0.0
        %1376 = vmatprep.subr.mxu0 0.0
        %1377 = vmatpush2.xpose.msra.mxu0 0.0
        %1378 = vmatprep.subr.mxu0 0.0
        %1379 = vmatpush2.xpose.msra.mxu0 0.0
        %1380 = vmatprep.subr.mxu0 0.0
        %1381 = vmatpush2.xpose.msra.mxu0 0.0
        %1382 = vmatprep.subr.mxu0 0.0
        %1383 = vmatpush2.xpose.msra.mxu0 0.0
        %1384 = vmatprep.subr.mxu0 0.0
        %1385 = vmatpush2.xpose.msra.mxu0 0.0
        %1386 = vmatprep.subr.mxu0 0.0
        %1387 = vmatpush2.xpose.msra.mxu0 0.0
        %1388 = vmatprep.subr.mxu0 0.0
        %1389 = vmatpush2.xpose.msra.mxu0 0.0
        %1390 = vmatprep.subr.mxu0 0.0
        %1391 = vmatpush2.xpose.msra.mxu0 0.0
        %1392 = vmatprep.subr.mxu0 0.0
        %1393 = vmatpush2.xpose.msra.mxu0 0.0
        %1394 = vmatprep.subr.mxu0 0.0
        %1395 = vmatpush2.xpose.msra.mxu0 0.0
        %1396 = vmatprep.subr.mxu0 0.0
        %1397 = vmatpush2.xpose.msra.mxu0 0.0
        %1398 = vmatprep.subr.mxu0 0.0
        %1399 = vmatpush2.xpose.msra.mxu0 0.0
        %1400 = vmatprep.subr.mxu0 0.0
        %1401 = vmatpush2.xpose.msra.mxu0 0.0
        %1402 = vmatprep.subr.mxu0 0.0
        %1403 = vmatpush2.xpose.msra.mxu0 0.0
        %1404 = vmatprep.subr.mxu0 0.0
        %1405 = vmatpush2.xpose.msra.mxu0 0.0
        %1406 = vmatprep.mubr.f32.mxu0 0.0
        %1407 = vmatmul.mubr.f32.gmra.mxu0 %v1338
        %v1408 = vpop.f32.mrf.mxu0
        %v1409 = vadd.f32 %v1333, %v1408
        %v1410 = vpop.f32.mrf.mxu0
        %1411 = vdwg.mxu0
        %v1412 = vsel %vm551, %v1409, -inf
        %1413 = vmax.xlane.f32.xlu0 %v1412
        %v1414 = vpop.xlane.xlu0 %1413
        %v1415 = vsub.f32 %v1409, %v1414
        %v1416 = vmul.f32 %v1415, 1.442695
        %v1417 = vpow.pop %v1416
        %v1418 = vsel %vm551, %v1417, 0.0
        %1419 = vadd.xlane.f32.xlu0 %v1418
        %v1420 = vpop.xlane.xlu0 %1419
        %v1421 = vrcp.pop %v1420
        %v1422 = vmul.f32 %v1417, %v1421
        %1423 = vrot.lane.b32.xlu0 %v469, 44
        %v1424 = vpop.permute.xlu0 %1423
        %v1427 = vsel %vm551, %v1422, 0
        %1429 = vmatprep.subr.mxu0 0.0
        %1430 = vmatpush1.msra.mxu0 0.0
        %1431 = vmatprep.subr.mxu0 0.0
        %1432 = vmatpush1.msra.mxu0 0.0
        %1433 = vmatprep.subr.mxu0 0.0
        %1434 = vmatpush1.msra.mxu0 0.0
        %1435 = vmatprep.subr.mxu0 0.0
        %1436 = vmatpush1.msra.mxu0 0.0
        %1437 = vmatprep.subr.mxu0 0.0
        %1438 = vmatpush1.msra.mxu0 0.0
        %1439 = vmatprep.subr.mxu0 0.0
        %1440 = vmatpush1.msra.mxu0 0.0
        %1441 = vmatprep.subr.mxu0 0.0
        %1442 = vmatpush1.msra.mxu0 0.0
        %1443 = vmatprep.subr.mxu0 0.0
        %1444 = vmatpush1.msra.mxu0 0.0
        %1445 = vmatprep.subr.mxu0 0.0
        %1446 = vmatpush1.msra.mxu0 0.0
        %1447 = vmatprep.subr.mxu0 0.0
        %1448 = vmatpush1.msra.mxu0 0.0
        %1449 = vmatprep.subr.mxu0 0.0
        %1450 = vmatpush1.msra.mxu0 0.0
        %1451 = vmatprep.subr.mxu0 0.0
        %1452 = vmatpush1.msra.mxu0 0.0
        %1453 = vmatprep.subr.mxu0 0.0
        %1454 = vmatpush1.msra.mxu0 0.0
        %1455 = vmatprep.subr.mxu0 0.0
        %1456 = vmatpush1.msra.mxu0 0.0
        %1457 = vmatprep.subr.mxu0 0.0
        %1458 = vmatpush1.msra.mxu0 0.0
        %1459 = vmatprep.subr.mxu0 0.0
        %1460 = vmatpush1.msra.mxu0 %v1424
        %1461 = vmatprep.subr.mxu0 0.0
        %1462 = vmatpush2.msra.mxu0 0.0
        %1463 = vmatprep.subr.mxu0 0.0
        %1464 = vmatpush2.msra.mxu0 0.0
        %1465 = vmatprep.subr.mxu0 0.0
        %1466 = vmatpush2.msra.mxu0 0.0
        %1467 = vmatprep.subr.mxu0 0.0
        %1468 = vmatpush2.msra.mxu0 0.0
        %1469 = vmatprep.subr.mxu0 0.0
        %1470 = vmatpush2.msra.mxu0 0.0
        %1471 = vmatprep.subr.mxu0 0.0
        %1472 = vmatpush2.msra.mxu0 0.0
        %1473 = vmatprep.subr.mxu0 0.0
        %1474 = vmatpush2.msra.mxu0 0.0
        %1475 = vmatprep.subr.mxu0 0.0
        %1476 = vmatpush2.msra.mxu0 0.0
        %1477 = vmatprep.subr.mxu0 0.0
        %1478 = vmatpush2.msra.mxu0 0.0
        %1479 = vmatprep.subr.mxu0 0.0
        %1480 = vmatpush2.msra.mxu0 0.0
        %1481 = vmatprep.subr.mxu0 0.0
        %1482 = vmatpush2.msra.mxu0 0.0
        %1483 = vmatprep.subr.mxu0 0.0
        %1484 = vmatpush2.msra.mxu0 0.0
        %1485 = vmatprep.subr.mxu0 0.0
        %1486 = vmatpush2.msra.mxu0 0.0
        %1487 = vmatprep.subr.mxu0 0.0
        %1488 = vmatpush2.msra.mxu0 0.0
        %1489 = vmatprep.subr.mxu0 0.0
        %1490 = vmatpush2.msra.mxu0 0.0
        %1491 = vmatprep.subr.mxu0 0.0
        %1492 = vmatpush2.msra.mxu0 0.0
        %1493 = vmatprep.mubr.f32.mxu0 0.0
        %1494 = vmatmul.mubr.f32.gmra.mxu0 %v1427
        %v1495 = vpop.f32.mrf.mxu0
        %v1496 = vadd.f32 0.0, %v1495
        %v1497 = vpop.f32.mrf.mxu0
        %1498 = vdwg.mxu0
        %1500 = vrot.lane.b32.xlu0 %v1496, 20
        %v1501 = vpop.permute.xlu0 %1500
        %vm1503 = vcmask 195744
        %1504 = vst.msk [vmem:[#allocation2] sm:$0xff] %vm1503, %v1501
        %s1505 = scalar_lea.vmem %s327, 48 [#allocation9]
        %v1506 = vld [vmem:[%s1505] sm:$0xff]
        %1507 = vrot.lane.b32.xlu0 %v469, 104
        %v1508 = vpop.permute.xlu0 %1507
        %1509 = vrot.lane.b32.xlu0 %v469, 72
        %v1510 = vpop.permute.xlu0 %1509
        %v1511 = vsel %vm476, %v1508, 0
        %v1513 = vsel %vm476, %v1510, 0
        %1515 = vmatprep.subr.mxu0 0.0
        %1516 = vmatpush1.xpose.msra.mxu0 0.0
        %1517 = vmatprep.subr.mxu0 0.0
        %1518 = vmatpush1.xpose.msra.mxu0 0.0
        %1519 = vmatprep.subr.mxu0 0.0
        %1520 = vmatpush1.xpose.msra.mxu0 0.0
        %1521 = vmatprep.subr.mxu0 0.0
        %1522 = vmatpush1.xpose.msra.mxu0 0.0
        %1523 = vmatprep.subr.mxu0 0.0
        %1524 = vmatpush1.xpose.msra.mxu0 0.0
        %1525 = vmatprep.subr.mxu0 0.0
        %1526 = vmatpush1.xpose.msra.mxu0 0.0
        %1527 = vmatprep.subr.mxu0 0.0
        %1528 = vmatpush1.xpose.msra.mxu0 0.0
        %1529 = vmatprep.subr.mxu0 0.0
        %1530 = vmatpush1.xpose.msra.mxu0 0.0
        %1531 = vmatprep.subr.mxu0 0.0
        %1532 = vmatpush1.xpose.msra.mxu0 0.0
        %1533 = vmatprep.subr.mxu0 0.0
        %1534 = vmatpush1.xpose.msra.mxu0 0.0
        %1535 = vmatprep.subr.mxu0 0.0
        %1536 = vmatpush1.xpose.msra.mxu0 0.0
        %1537 = vmatprep.subr.mxu0 0.0
        %1538 = vmatpush1.xpose.msra.mxu0 0.0
        %1539 = vmatprep.subr.mxu0 0.0
        %1540 = vmatpush1.xpose.msra.mxu0 0.0
        %1541 = vmatprep.subr.mxu0 0.0
        %1542 = vmatpush1.xpose.msra.mxu0 0.0
        %1543 = vmatprep.subr.mxu0 0.0
        %1544 = vmatpush1.xpose.msra.mxu0 0.0
        %1545 = vmatprep.subr.mxu0 0.0
        %1546 = vmatpush1.xpose.msra.mxu0 %v1513
        %1547 = vmatprep.subr.mxu0 0.0
        %1548 = vmatpush2.xpose.msra.mxu0 0.0
        %1549 = vmatprep.subr.mxu0 0.0
        %1550 = vmatpush2.xpose.msra.mxu0 0.0
        %1551 = vmatprep.subr.mxu0 0.0
        %1552 = vmatpush2.xpose.msra.mxu0 0.0
        %1553 = vmatprep.subr.mxu0 0.0
        %1554 = vmatpush2.xpose.msra.mxu0 0.0
        %1555 = vmatprep.subr.mxu0 0.0
        %1556 = vmatpush2.xpose.msra.mxu0 0.0
        %1557 = vmatprep.subr.mxu0 0.0
        %1558 = vmatpush2.xpose.msra.mxu0 0.0
        %1559 = vmatprep.subr.mxu0 0.0
        %1560 = vmatpush2.xpose.msra.mxu0 0.0
        %1561 = vmatprep.subr.mxu0 0.0
        %1562 = vmatpush2.xpose.msra.mxu0 0.0
        %1563 = vmatprep.subr.mxu0 0.0
        %1564 = vmatpush2.xpose.msra.mxu0 0.0
        %1565 = vmatprep.subr.mxu0 0.0
        %1566 = vmatpush2.xpose.msra.mxu0 0.0
        %1567 = vmatprep.subr.mxu0 0.0
        %1568 = vmatpush2.xpose.msra.mxu0 0.0
        %1569 = vmatprep.subr.mxu0 0.0
        %1570 = vmatpush2.xpose.msra.mxu0 0.0
        %1571 = vmatprep.subr.mxu0 0.0
        %1572 = vmatpush2.xpose.msra.mxu0 0.0
        %1573 = vmatprep.subr.mxu0 0.0
        %1574 = vmatpush2.xpose.msra.mxu0 0.0
        %1575 = vmatprep.subr.mxu0 0.0
        %1576 = vmatpush2.xpose.msra.mxu0 0.0
        %1577 = vmatprep.subr.mxu0 0.0
        %1578 = vmatpush2.xpose.msra.mxu0 0.0
        %1579 = vmatprep.mubr.f32.mxu0 0.0
        %1580 = vmatmul.mubr.f32.gmra.mxu0 %v1511
        %v1581 = vpop.f32.mrf.mxu0
        %v1582 = vadd.f32 %v1506, %v1581
        %v1583 = vpop.f32.mrf.mxu0
        %1584 = vdwg.mxu0
        %v1585 = vsel %vm551, %v1582, -inf
        %1586 = vmax.xlane.f32.xlu0 %v1585
        %v1587 = vpop.xlane.xlu0 %1586
        %v1588 = vsub.f32 %v1582, %v1587
        %v1589 = vmul.f32 %v1588, 1.442695
        %v1590 = vpow.pop %v1589
        %v1591 = vsel %vm551, %v1590, 0.0
        %1592 = vadd.xlane.f32.xlu0 %v1591
        %v1593 = vpop.xlane.xlu0 %1592
        %v1594 = vrcp.pop %v1593
        %v1595 = vmul.f32 %v1590, %v1594
        %1596 = vrot.lane.b32.xlu0 %v469, 40
        %v1597 = vpop.permute.xlu0 %1596
        %v1600 = vsel %vm551, %v1595, 0
        %1602 = vmatprep.subr.mxu0 0.0
        %1603 = vmatpush1.msra.mxu0 0.0
        %1604 = vmatprep.subr.mxu0 0.0
        %1605 = vmatpush1.msra.mxu0 0.0
        %1606 = vmatprep.subr.mxu0 0.0
        %1607 = vmatpush1.msra.mxu0 0.0
        %1608 = vmatprep.subr.mxu0 0.0
        %1609 = vmatpush1.msra.mxu0 0.0
        %1610 = vmatprep.subr.mxu0 0.0
        %1611 = vmatpush1.msra.mxu0 0.0
        %1612 = vmatprep.subr.mxu0 0.0
        %1613 = vmatpush1.msra.mxu0 0.0
        %1614 = vmatprep.subr.mxu0 0.0
        %1615 = vmatpush1.msra.mxu0 0.0
        %1616 = vmatprep.subr.mxu0 0.0
        %1617 = vmatpush1.msra.mxu0 0.0
        %1618 = vmatprep.subr.mxu0 0.0
        %1619 = vmatpush1.msra.mxu0 0.0
        %1620 = vmatprep.subr.mxu0 0.0
        %1621 = vmatpush1.msra.mxu0 0.0
        %1622 = vmatprep.subr.mxu0 0.0
        %1623 = vmatpush1.msra.mxu0 0.0
        %1624 = vmatprep.subr.mxu0 0.0
        %1625 = vmatpush1.msra.mxu0 0.0
        %1626 = vmatprep.subr.mxu0 0.0
        %1627 = vmatpush1.msra.mxu0 0.0
        %1628 = vmatprep.subr.mxu0 0.0
        %1629 = vmatpush1.msra.mxu0 0.0
        %1630 = vmatprep.subr.mxu0 0.0
        %1631 = vmatpush1.msra.mxu0 0.0
        %1632 = vmatprep.subr.mxu0 0.0
        %1633 = vmatpush1.msra.mxu0 %v1597
        %1634 = vmatprep.subr.mxu0 0.0
        %1635 = vmatpush2.msra.mxu0 0.0
        %1636 = vmatprep.subr.mxu0 0.0
        %1637 = vmatpush2.msra.mxu0 0.0
        %1638 = vmatprep.subr.mxu0 0.0
        %1639 = vmatpush2.msra.mxu0 0.0
        %1640 = vmatprep.subr.mxu0 0.0
        %1641 = vmatpush2.msra.mxu0 0.0
        %1642 = vmatprep.subr.mxu0 0.0
        %1643 = vmatpush2.msra.mxu0 0.0
        %1644 = vmatprep.subr.mxu0 0.0
        %1645 = vmatpush2.msra.mxu0 0.0
        %1646 = vmatprep.subr.mxu0 0.0
        %1647 = vmatpush2.msra.mxu0 0.0
        %1648 = vmatprep.subr.mxu0 0.0
        %1649 = vmatpush2.msra.mxu0 0.0
        %1650 = vmatprep.subr.mxu0 0.0
        %1651 = vmatpush2.msra.mxu0 0.0
        %1652 = vmatprep.subr.mxu0 0.0
        %1653 = vmatpush2.msra.mxu0 0.0
        %1654 = vmatprep.subr.mxu0 0.0
        %1655 = vmatpush2.msra.mxu0 0.0
        %1656 = vmatprep.subr.mxu0 0.0
        %1657 = vmatpush2.msra.mxu0 0.0
        %1658 = vmatprep.subr.mxu0 0.0
        %1659 = vmatpush2.msra.mxu0 0.0
        %1660 = vmatprep.subr.mxu0 0.0
        %1661 = vmatpush2.msra.mxu0 0.0
        %1662 = vmatprep.subr.mxu0 0.0
        %1663 = vmatpush2.msra.mxu0 0.0
        %1664 = vmatprep.subr.mxu0 0.0
        %1665 = vmatpush2.msra.mxu0 0.0
        %1666 = vmatprep.mubr.f32.mxu0 0.0
        %1667 = vmatmul.mubr.f32.gmra.mxu0 %v1600
        %v1668 = vpop.f32.mrf.mxu0
        %v1669 = vadd.f32 0.0, %v1668
        %v1670 = vpop.f32.mrf.mxu0
        %1671 = vdwg.mxu0
        %1673 = vrot.lane.b32.xlu0 %v1669, 24
        %v1674 = vpop.permute.xlu0 %1673
        %vm1676 = vcmask 228544
        %1677 = vst.msk [vmem:[#allocation2] sm:$0xff] %vm1676, %v1674
        %s1678 = scalar_lea.vmem %s327, 56 [#allocation9]
        %v1679 = vld [vmem:[%s1678] sm:$0xff]
        %1680 = vrot.lane.b32.xlu0 %v469, 100
        %v1681 = vpop.permute.xlu0 %1680
        %1682 = vrot.lane.b32.xlu0 %v469, 68
        %v1683 = vpop.permute.xlu0 %1682
        %v1684 = vsel %vm476, %v1681, 0
        %v1686 = vsel %vm476, %v1683, 0
        %1688 = vmatprep.subr.mxu0 0.0
        %1689 = vmatpush1.xpose.msra.mxu0 0.0
        %1690 = vmatprep.subr.mxu0 0.0
        %1691 = vmatpush1.xpose.msra.mxu0 0.0
        %1692 = vmatprep.subr.mxu0 0.0
        %1693 = vmatpush1.xpose.msra.mxu0 0.0
        %1694 = vmatprep.subr.mxu0 0.0
        %1695 = vmatpush1.xpose.msra.mxu0 0.0
        %1696 = vmatprep.subr.mxu0 0.0
        %1697 = vmatpush1.xpose.msra.mxu0 0.0
        %1698 = vmatprep.subr.mxu0 0.0
        %1699 = vmatpush1.xpose.msra.mxu0 0.0
        %1700 = vmatprep.subr.mxu0 0.0
        %1701 = vmatpush1.xpose.msra.mxu0 0.0
        %1702 = vmatprep.subr.mxu0 0.0
        %1703 = vmatpush1.xpose.msra.mxu0 0.0
        %1704 = vmatprep.subr.mxu0 0.0
        %1705 = vmatpush1.xpose.msra.mxu0 0.0
        %1706 = vmatprep.subr.mxu0 0.0
        %1707 = vmatpush1.xpose.msra.mxu0 0.0
        %1708 = vmatprep.subr.mxu0 0.0
        %1709 = vmatpush1.xpose.msra.mxu0 0.0
        %1710 = vmatprep.subr.mxu0 0.0
        %1711 = vmatpush1.xpose.msra.mxu0 0.0
        %1712 = vmatprep.subr.mxu0 0.0
        %1713 = vmatpush1.xpose.msra.mxu0 0.0
        %1714 = vmatprep.subr.mxu0 0.0
        %1715 = vmatpush1.xpose.msra.mxu0 0.0
        %1716 = vmatprep.subr.mxu0 0.0
        %1717 = vmatpush1.xpose.msra.mxu0 0.0
        %1718 = vmatprep.subr.mxu0 0.0
        %1719 = vmatpush1.xpose.msra.mxu0 %v1686
        %1720 = vmatprep.subr.mxu0 0.0
        %1721 = vmatpush2.xpose.msra.mxu0 0.0
        %1722 = vmatprep.subr.mxu0 0.0
        %1723 = vmatpush2.xpose.msra.mxu0 0.0
        %1724 = vmatprep.subr.mxu0 0.0
        %1725 = vmatpush2.xpose.msra.mxu0 0.0
        %1726 = vmatprep.subr.mxu0 0.0
        %1727 = vmatpush2.xpose.msra.mxu0 0.0
        %1728 = vmatprep.subr.mxu0 0.0
        %1729 = vmatpush2.xpose.msra.mxu0 0.0
        %1730 = vmatprep.subr.mxu0 0.0
        %1731 = vmatpush2.xpose.msra.mxu0 0.0
        %1732 = vmatprep.subr.mxu0 0.0
        %1733 = vmatpush2.xpose.msra.mxu0 0.0
        %1734 = vmatprep.subr.mxu0 0.0
        %1735 = vmatpush2.xpose.msra.mxu0 0.0
        %1736 = vmatprep.subr.mxu0 0.0
        %1737 = vmatpush2.xpose.msra.mxu0 0.0
        %1738 = vmatprep.subr.mxu0 0.0
        %1739 = vmatpush2.xpose.msra.mxu0 0.0
        %1740 = vmatprep.subr.mxu0 0.0
        %1741 = vmatpush2.xpose.msra.mxu0 0.0
        %1742 = vmatprep.subr.mxu0 0.0
        %1743 = vmatpush2.xpose.msra.mxu0 0.0
        %1744 = vmatprep.subr.mxu0 0.0
        %1745 = vmatpush2.xpose.msra.mxu0 0.0
        %1746 = vmatprep.subr.mxu0 0.0
        %1747 = vmatpush2.xpose.msra.mxu0 0.0
        %1748 = vmatprep.subr.mxu0 0.0
        %1749 = vmatpush2.xpose.msra.mxu0 0.0
        %1750 = vmatprep.subr.mxu0 0.0
        %1751 = vmatpush2.xpose.msra.mxu0 0.0
        %1752 = vmatprep.mubr.f32.mxu0 0.0
        %1753 = vmatmul.mubr.f32.gmra.mxu0 %v1684
        %v1754 = vpop.f32.mrf.mxu0
        %v1755 = vadd.f32 %v1679, %v1754
        %v1756 = vpop.f32.mrf.mxu0
        %1757 = vdwg.mxu0
        %v1758 = vsel %vm551, %v1755, -inf
        %1759 = vmax.xlane.f32.xlu0 %v1758
        %v1760 = vpop.xlane.xlu0 %1759
        %v1761 = vsub.f32 %v1755, %v1760
        %v1762 = vmul.f32 %v1761, 1.442695
        %v1763 = vpow.pop %v1762
        %v1764 = vsel %vm551, %v1763, 0.0
        %1765 = vadd.xlane.f32.xlu0 %v1764
        %v1766 = vpop.xlane.xlu0 %1765
        %v1767 = vrcp.pop %v1766
        %v1768 = vmul.f32 %v1763, %v1767
        %1769 = vrot.lane.b32.xlu0 %v469, 36
        %v1770 = vpop.permute.xlu0 %1769
        %v1773 = vsel %vm551, %v1768, 0
        %1775 = vmatprep.subr.mxu0 0.0
        %1776 = vmatpush1.msra.mxu0 0.0
        %1777 = vmatprep.subr.mxu0 0.0
        %1778 = vmatpush1.msra.mxu0 0.0
        %1779 = vmatprep.subr.mxu0 0.0
        %1780 = vmatpush1.msra.mxu0 0.0
        %1781 = vmatprep.subr.mxu0 0.0
        %1782 = vmatpush1.msra.mxu0 0.0
        %1783 = vmatprep.subr.mxu0 0.0
        %1784 = vmatpush1.msra.mxu0 0.0
        %1785 = vmatprep.subr.mxu0 0.0
        %1786 = vmatpush1.msra.mxu0 0.0
        %1787 = vmatprep.subr.mxu0 0.0
        %1788 = vmatpush1.msra.mxu0 0.0
        %1789 = vmatprep.subr.mxu0 0.0
        %1790 = vmatpush1.msra.mxu0 0.0
        %1791 = vmatprep.subr.mxu0 0.0
        %1792 = vmatpush1.msra.mxu0 0.0
        %1793 = vmatprep.subr.mxu0 0.0
        %1794 = vmatpush1.msra.mxu0 0.0
        %1795 = vmatprep.subr.mxu0 0.0
        %1796 = vmatpush1.msra.mxu0 0.0
        %1797 = vmatprep.subr.mxu0 0.0
        %1798 = vmatpush1.msra.mxu0 0.0
        %1799 = vmatprep.subr.mxu0 0.0
        %1800 = vmatpush1.msra.mxu0 0.0
        %1801 = vmatprep.subr.mxu0 0.0
        %1802 = vmatpush1.msra.mxu0 0.0
        %1803 = vmatprep.subr.mxu0 0.0
        %1804 = vmatpush1.msra.mxu0 0.0
        %1805 = vmatprep.subr.mxu0 0.0
        %1806 = vmatpush1.msra.mxu0 %v1770
        %1807 = vmatprep.subr.mxu0 0.0
        %1808 = vmatpush2.msra.mxu0 0.0
        %1809 = vmatprep.subr.mxu0 0.0
        %1810 = vmatpush2.msra.mxu0 0.0
        %1811 = vmatprep.subr.mxu0 0.0
        %1812 = vmatpush2.msra.mxu0 0.0
        %1813 = vmatprep.subr.mxu0 0.0
        %1814 = vmatpush2.msra.mxu0 0.0
        %1815 = vmatprep.subr.mxu0 0.0
        %1816 = vmatpush2.msra.mxu0 0.0
        %1817 = vmatprep.subr.mxu0 0.0
        %1818 = vmatpush2.msra.mxu0 0.0
        %1819 = vmatprep.subr.mxu0 0.0
        %1820 = vmatpush2.msra.mxu0 0.0
        %1821 = vmatprep.subr.mxu0 0.0
        %1822 = vmatpush2.msra.mxu0 0.0
        %1823 = vmatprep.subr.mxu0 0.0
        %1824 = vmatpush2.msra.mxu0 0.0
        %1825 = vmatprep.subr.mxu0 0.0
        %1826 = vmatpush2.msra.mxu0 0.0
        %1827 = vmatprep.subr.mxu0 0.0
        %1828 = vmatpush2.msra.mxu0 0.0
        %1829 = vmatprep.subr.mxu0 0.0
        %1830 = vmatpush2.msra.mxu0 0.0
        %1831 = vmatprep.subr.mxu0 0.0
        %1832 = vmatpush2.msra.mxu0 0.0
        %1833 = vmatprep.subr.mxu0 0.0
        %1834 = vmatpush2.msra.mxu0 0.0
        %1835 = vmatprep.subr.mxu0 0.0
        %1836 = vmatpush2.msra.mxu0 0.0
        %1837 = vmatprep.subr.mxu0 0.0
        %1838 = vmatpush2.msra.mxu0 0.0
        %1839 = vmatprep.mubr.f32.mxu0 0.0
        %1840 = vmatmul.mubr.f32.gmra.mxu0 %v1773
        %v1841 = vpop.f32.mrf.mxu0
        %v1842 = vadd.f32 0.0, %v1841
        %v1843 = vpop.f32.mrf.mxu0
        %1844 = vdwg.mxu0
        %1846 = vrot.lane.b32.xlu0 %v1842, 28
        %v1847 = vpop.permute.xlu0 %1846
        %vm1849 = vcmask 261344
        %1850 = vst.msk [vmem:[#allocation2] sm:$0xff] %vm1849, %v1847
        %v1851 = vld [vmem:[#allocation2] sm:$0xff]
        %v1852 = vld [vmem:[#allocation8] sm:$0xff]
        %v1853 = vld [vmem:[#allocation8 + $0x8] sm:$0xff]
        %v1854 = vld [vmem:[#allocation8 + $0x10] sm:$0xff]
        %v1855 = vld [vmem:[#allocation8 + $0x18] sm:$0xff]
        %v1856 = vld [vmem:[%s5] sm:$0x1]
        %v1858 = vlaneseq
        %v1859 = vshrl.u32 %v1858, 7
        %v1860 = vsub.s32 0, %v1859
        %v1861 = vrot.slane %v1856, %v1860
        %v1864 = vsel %vm364, %v1851, 0
        %1866 = vmatprep.subr.mxu0 0.0
        %1867 = vmatpush1.msra.mxu0 0.0
        %1868 = vmatprep.subr.mxu0 0.0
        %1869 = vmatpush1.msra.mxu0 0.0
        %1870 = vmatprep.subr.mxu0 0.0
        %1871 = vmatpush1.msra.mxu0 0.0
        %1872 = vmatprep.subr.mxu0 0.0
        %1873 = vmatpush1.msra.mxu0 0.0
        %1874 = vmatprep.subr.mxu0 0.0
        %1875 = vmatpush1.msra.mxu0 0.0
        %1876 = vmatprep.subr.mxu0 0.0
        %1877 = vmatpush1.msra.mxu0 0.0
        %1878 = vmatprep.subr.mxu0 0.0
        %1879 = vmatpush1.msra.mxu0 0.0
        %1880 = vmatprep.subr.mxu0 0.0
        %1881 = vmatpush1.msra.mxu0 0.0
        %1882 = vmatprep.subr.mxu0 0.0
        %1883 = vmatpush1.msra.mxu0 0.0
        %1884 = vmatprep.subr.mxu0 0.0
        %1885 = vmatpush1.msra.mxu0 0.0
        %1886 = vmatprep.subr.mxu0 0.0
        %1887 = vmatpush1.msra.mxu0 0.0
        %1888 = vmatprep.subr.mxu0 0.0
        %1889 = vmatpush1.msra.mxu0 0.0
        %1890 = vmatprep.subr.mxu0 0.0
        %1891 = vmatpush1.msra.mxu0 %v1855
        %1892 = vmatprep.subr.mxu0 0.0
        %1893 = vmatpush1.msra.mxu0 %v1854
        %1894 = vmatprep.subr.mxu0 0.0
        %1895 = vmatpush1.msra.mxu0 %v1853
        %1896 = vmatprep.subr.mxu0 0.0
        %1897 = vmatpush1.msra.mxu0 %v1852
        %1898 = vmatprep.subr.mxu0 0.0
        %1899 = vmatpush2.msra.mxu0 0.0
        %1900 = vmatprep.subr.mxu0 0.0
        %1901 = vmatpush2.msra.mxu0 0.0
        %1902 = vmatprep.subr.mxu0 0.0
        %1903 = vmatpush2.msra.mxu0 0.0
        %1904 = vmatprep.subr.mxu0 0.0
        %1905 = vmatpush2.msra.mxu0 0.0
        %1906 = vmatprep.subr.mxu0 0.0
        %1907 = vmatpush2.msra.mxu0 0.0
        %1908 = vmatprep.subr.mxu0 0.0
        %1909 = vmatpush2.msra.mxu0 0.0
        %1910 = vmatprep.subr.mxu0 0.0
        %1911 = vmatpush2.msra.mxu0 0.0
        %1912 = vmatprep.subr.mxu0 0.0
        %1913 = vmatpush2.msra.mxu0 0.0
        %1914 = vmatprep.subr.mxu0 0.0
        %1915 = vmatpush2.msra.mxu0 0.0
        %1916 = vmatprep.subr.mxu0 0.0
        %1917 = vmatpush2.msra.mxu0 0.0
        %1918 = vmatprep.subr.mxu0 0.0
        %1919 = vmatpush2.msra.mxu0 0.0
        %1920 = vmatprep.subr.mxu0 0.0
        %1921 = vmatpush2.msra.mxu0 0.0
        %1922 = vmatprep.subr.mxu0 0.0
        %1923 = vmatpush2.msra.mxu0 0.0
        %1924 = vmatprep.subr.mxu0 0.0
        %1925 = vmatpush2.msra.mxu0 0.0
        %1926 = vmatprep.subr.mxu0 0.0
        %1927 = vmatpush2.msra.mxu0 0.0
        %1928 = vmatprep.subr.mxu0 0.0
        %1929 = vmatpush2.msra.mxu0 0.0
        %1930 = vmatprep.mubr.f32.mxu0 0.0
        %1931 = vmatmul.mubr.f32.gmra.mxu0 %v1864
        %v1932 = vpop.f32.mrf.mxu0
        %v1933 = vadd.f32 %v1861, %v1932
        %v1934 = vpop.f32.mrf.mxu0
        %1935 = vdwg.mxu0
        %1936 = vst.msk [vmem:[%s362] sm:$0xff] %vm364, %v1933
        %s1937 = sand.u32 %s193, 1
        %s1938 = scalar_lea.sflag [#allocation5], %s1937
        %s1939 = sand.u32 %s193, 1
        %s1940 = smul.addr %s1939, 8
        %s1941 = scalar_lea.vmem [#allocation11], %s1940
        // Predicated region
        $region65: #{tpu_custom_call.1} parent=47 // pred_check
          %p1942 = pneg %p203
        $region66: #{tpu_custom_call.1} parent=47 // pred_check_branch
          %1944 = sbr.rel (%p1942) target = $region68
        $region67: #{tpu_custom_call.1} parent=47 // pred_region
          %s1946 = ssub.s32 128, 128
          %1947 = vsyncadd %s1938, %s1946
          %s1948 = smul.addr %s28, 128
          %s1949 = scalar_lea.hbm %s7, %s1948
          %s1951 = sshll.u32 %s1941, 4
          %s1952 = int_to_ptr.vmem [resolvable:$true] %s1951
          %1954 = dma.vmem_to_hbm [thread:$0]  %s1952, 128, %s1949, %s1938
        $region68: #{tpu_custom_call.1} parent=47 // pred_fallthru
          _
      $region48: #{tpu_custom_call.1} parent=5 // pred_fallthru
        _
      %p1955 = scmp.le.s32.totalorder 2, %s23
      // Predicated region
      $region69: #{tpu_custom_call.1} parent=5 // pred_check
        %p1956 = pneg %p1955
      $region70: #{tpu_custom_call.1} parent=5 // pred_check_branch
        %1958 = sbr.rel (%p1956) target = $region72
      $region71: #{tpu_custom_call.1} parent=5 // pred_region
        %s1959 = ssub.s32 %s23, 2
        // Predicated region
        $region73: #{tpu_custom_call.1} parent=71 // pred_check
          %p1960 = pneg %p209
        $region74: #{tpu_custom_call.1} parent=71 // pred_check_branch
          %1962 = sbr.rel (%p1960) target = $region76
        $region75: #{tpu_custom_call.1} parent=71 // pred_region
          %s1963 = sand.u32 %s194, 1
          %s1964 = scalar_lea.sflag [#allocation5], %s1963
          %s1965 = sand.u32 %s194, 1
          %s1966 = smul.addr %s1965, 8
          %s1967 = scalar_lea.vmem [#allocation11], %s1966
          %1968 = dma.done %s1964, 128
        $region76: #{tpu_custom_call.1} parent=71 // pred_fallthru
          _
      $region72: #{tpu_custom_call.1} parent=5 // pred_fallthru
        _
    $region6: #{tpu_custom_call.1} parent=1 // loop_footer
      %s27 = sadd.s32 1, %s23
    $region7: #{tpu_custom_call.1} parent=1 // loop_footer_branch
      %22 = sbr.rel target = $region3
    $region8: #{tpu_custom_call.1} parent=1 // loop_exit
      _
    %1969 = vsyncpa [#allocation4], 1
    %s1970 = scalar_lea.sflag [#allocation4], 1
    %1971 = vsyncpa %s1970, 1
    %1972 = vsyncpa [#allocation7], 1
    %1973 = vsyncpa [#allocation10], 1
    %s1974 = scalar_lea.sflag [#allocation10], 1
    %1975 = vsyncpa %s1974, 1
    %1976 = vsyncpa [#allocation5], 1
    %s1977 = scalar_lea.sflag [#allocation5], 1
    %1978 = vsyncpa %s1977, 1

</llo_original>
